<compile_context>
chip_gen: v7x
topology: tpu7x:2x2x1
jax: 0.10.0
libtpu: 0.0.40
codegen_flags: <defaults>
</compile_context>

<pallas_src>
import functools

import jax
import jax.numpy as jnp
from jax.experimental import pallas as pl
from jax.experimental.pallas import tpu as pltpu

LANE = 128  # TPU lane width; each GRU gate gets its own 128-lane column slot.


# ---------------- Fused Pallas kernel ----------------

def make_decoder_kernel(n_layers, n_steps, squeeze_pred):
    """Fused decoder kernel for a fixed layer count / step count (static unroll)."""
    L2 = 2 * n_layers

    def kernel(ids_ref, emb_ref, h0_ref, *rest):
        # Unpack (inputs..., outputs..., scratch...) by closure-known counts.
        pos = 0
        wih_refs = rest[pos:pos + n_layers]; pos += n_layers       # (In_l, 6*128) bf16
        bi_refs = rest[pos:pos + n_layers]; pos += n_layers        # (1, 6*128) f32
        whh_refs = rest[pos:pos + L2]; pos += L2                   # (H, 3*128) bf16
        bhn_refs = rest[pos:pos + L2]; pos += L2                   # (1, H) f32
        fcw_ref, fcb_ref, pred_ref, hid_ref, xrow_buf, gather_sem = rest[pos:pos + 6]

        B, E = xrow_buf.shape
        H = h0_ref.shape[2]
        V = emb_ref.shape[0]

        # Current hidden state per (layer, direction) cell, carried across steps.
        h_cur = [h0_ref[idx, :, :] for idx in range(L2)]           # each (B, H) f32

        for t in range(n_steps):
            # ---- Embedding gather: one small DMA per batch row from the HBM table. ----
            copies = []
            for i in range(B):
                row = jnp.clip(ids_ref[t, i], 0, V - 1)            # clamp like jnp.take
                cp = pltpu.make_async_copy(emb_ref.at[pl.ds(row, 1), :],
                                           xrow_buf.at[pl.ds(i, 1), :],
                                           gather_sem.at[i])
                cp.start()
                copies.append(cp)
            for cp in copies:
                cp.wait()
            x = xrow_buf[...]                                      # (B, E) f32
            # TODO(synk): nn.Dropout is identity in eval mode; training-mode dropout not implemented.

            # ---- n_layers x 2 GRU cells (seq_len == 1), fully unrolled. ----
            for layer in range(n_layers):
                # x-side matmul shared across both directions (bf16 operands, f32 acc).
                gi = jnp.dot(x.astype(jnp.bfloat16), wih_refs[layer][...],
                             preferred_element_type=jnp.float32) + bi_refs[layer][...]
                outs = []
                for d in range(2):
                    idx = 2 * layer + d
                    h = h_cur[idx]                                 # (B, H) f32
                    gh = jnp.dot(h.astype(jnp.bfloat16), whh_refs[idx][...],
                                 preferred_element_type=jnp.float32)   # (B, 3*128)
                    o = d * 3 * LANE                               # 128-aligned gate slots
                    r = jax.nn.sigmoid(gi[:, o:o + H] + gh[:, 0:H])
                    z = jax.nn.sigmoid(gi[:, o + LANE:o + LANE + H]
                                       + gh[:, LANE:LANE + H])
                    n = jnp.tanh(gi[:, o + 2 * LANE:o + 2 * LANE + H]
                                 + r * (gh[:, 2 * LANE:2 * LANE + H] + bhn_refs[idx][...]))
                    h_new = (1.0 - z) * n + z * h                  # f32 gate math (v5e-safe)
                    h_cur[idx] = h_new
                    outs.append(h_new)
                x = jnp.concatenate(outs, axis=-1)                 # (B, 2H)

            # ---- Final Linear on [h_fwd | h_bwd] of the last layer. ----
            pred = jnp.dot(x.astype(jnp.bfloat16), fcw_ref[...],
                           preferred_element_type=jnp.float32) + fcb_ref[...]
            if squeeze_pred:
                pred_ref[...] = pred                               # (B, O)
            else:
                pred_ref[t, :, :] = pred                           # (T, B, O)

        for idx in range(L2):
            hid_ref[idx, :, :] = h_cur[idx]

    return kernel


# ---------------- Parameter setup (PyTorch-like raw shapes) ----------------

def init_params(key, output_size, embed_size, hidden_size, n_layers):
    keys = iter(jax.random.split(key, 64))
    bound = 1.0 / jnp.sqrt(hidden_size)

    def u(shape):
        return jax.random.uniform(next(keys), shape, jnp.float32, -bound, bound)

    params = {"embedding": jax.random.normal(next(keys), (output_size, embed_size),
                                             jnp.float32) * 0.1}
    # GRU weights: index = layer * 2 + direction (PyTorch bidirectional ordering).
    w_ih_t, w_hh_t, b_ih, b_hh = [], [], [], []
    for layer in range(n_layers):
        in_size = embed_size if layer == 0 else 2 * hidden_size
        for _direction in range(2):
            w_ih_t.append(u((in_size, 3 * hidden_size)))       # transposed weight_ih
            w_hh_t.append(u((hidden_size, 3 * hidden_size)))   # transposed weight_hh
            b_ih.append(u((1, 3 * hidden_size)))
            b_hh.append(u((1, 3 * hidden_size)))
    params.update(w_ih_t=w_ih_t, w_hh_t=w_hh_t, b_ih=b_ih, b_hh=b_hh)
    params["fc_w_t"] = u((2 * hidden_size, output_size))       # transposed fc weight
    params["fc_b"] = u((1, output_size))
    return params


# ---------------- Host-side packing: compact rows, lane-aligned gate columns ----------------

def pack_params(params, output_size, embed_size, hidden_size, n_layers):
    H, Hp = hidden_size, LANE
    assert H <= Hp, "hidden_size must fit in one lane span for this packing"
    L2 = 2 * n_layers

    wih_p, bi_p, whh_p, bhn_p = [], [], [], []
    for layer in range(n_layers):
        in_rows = embed_size if layer == 0 else 2 * H          # compact rows
        wih = jnp.zeros((in_rows, 6 * Hp), jnp.float32)
        bi = jnp.zeros((1, 6 * Hp), jnp.float32)
        for d in range(2):
            idx = 2 * layer + d
            w = params["w_ih_t"][idx]                          # (in_rows, 3H)
            col_base = d * 3 * Hp
            for g in range(3):
                wih = wih.at[:, col_base + g * Hp: col_base + g * Hp + H].set(
                    w[:, g * H:(g + 1) * H])
            b_i = params["b_ih"][idx][0]                       # (3H,)
            b_h = params["b_hh"][idx][0]                       # (3H,)
            for g in range(3):
                bg = b_i[g * H:(g + 1) * H]
                if g < 2:                                      # fold b_hh into r, z biases
                    bg = bg + b_h[g * H:(g + 1) * H]
                bi = bi.at[0, col_base + g * Hp: col_base + g * Hp + H].set(bg)

            whh = jnp.zeros((H, 3 * Hp), jnp.float32)          # compact rows, padded gates
            for g in range(3):
                whh = whh.at[:, g * Hp: g * Hp + H].set(
                    params["w_hh_t"][idx][:, g * H:(g + 1) * H])
            whh_p.append(whh.astype(jnp.bfloat16))
            bhn_p.append(b_h[2 * H:3 * H].reshape(1, H))       # f32, stays inside r*() term
        wih_p.append(wih.astype(jnp.bfloat16))
        bi_p.append(bi)                                        # biases stay f32

    return {"emb": params["embedding"],                        # (V, E) f32, DMA-gathered
            "wih": wih_p, "bi": bi_p, "whh": whh_p, "bhn": bhn_p,
            "fcw": params["fc_w_t"].astype(jnp.bfloat16),      # (2H, O) compact
            "fcb": params["fc_b"]}                             # (1, O) f32


# ---------------- pallas_call builder + forward passes ----------------

def _decoder_pallas_call(packed, ids_tb, encoder_hidden, *, single_step):
    T, B = ids_tb.shape
    L2, _, H = encoder_hidden.shape
    n_layers = L2 // 2
    E = packed["emb"].shape[1]
    O = packed["fcw"].shape[1]

    args = ([ids_tb, packed["emb"], encoder_hidden.astype(jnp.float32)]
            + list(packed["wih"]) + list(packed["bi"])
            + list(packed["whh"]) + list(packed["bhn"])
            + [packed["fcw"], packed["fcb"]])

    smem_spec = pl.BlockSpec(memory_space=pltpu.MemorySpace.SMEM)   # token ids (scalars)
    hbm_spec = pl.BlockSpec(memory_space=pl.ANY)                    # embedding table stays in HBM
    vmem_spec = pl.BlockSpec(memory_space=pltpu.MemorySpace.VMEM)   # weights / hidden / outputs

    pred_shape = (B, O) if single_step else (T, B, O)
    out_shape = (jax.ShapeDtypeStruct(pred_shape, jnp.float32),
                 jax.ShapeDtypeStruct((L2, B, H), jnp.float32))

    return pl.pallas_call(
        make_decoder_kernel(n_layers, T, single_step),
        out_shape=out_shape,
        in_specs=[smem_spec, hbm_spec] + [vmem_spec] * (len(args) - 2),
        out_specs=(vmem_spec, vmem_spec),
        scratch_shapes=[pltpu.VMEM((B, E), jnp.float32),            # gathered embedding rows
                        pltpu.SemaphoreType.DMA((B,))],             # one sem per gather DMA
        compiler_params=pltpu.CompilerParams(vmem_limit_bytes=32 * 1024 * 1024),
    )(*args)


@jax.jit
def decoder_forward_pallas(packed, input_ids, encoder_hidden):
    """Single decode step, matching Decoder.forward: ids (B,), hidden (2L, B, H)."""
    ids = input_ids.astype(jnp.int32).reshape(1, -1)                # (T=1, B)
    return _decoder_pallas_call(packed, ids, encoder_hidden, single_step=True)


@jax.jit
def decoder_forward_pallas_steps(packed, input_ids_tb, encoder_hidden):
    """T teacher-forced decode steps fused into one kernel (weights DMA'd once)."""
    return _decoder_pallas_call(packed, input_ids_tb.astype(jnp.int32),
                                encoder_hidden, single_step=False)


# ---------------- Pure-JAX references (PyTorch GRU semantics, eval mode) ----------------

def decoder_forward_ref(params, input_ids, encoder_hidden, n_layers, hidden_size):
    H = hidden_size
    x = jnp.take(params["embedding"], input_ids, axis=0)
    new_hidden = []
    for layer in range(n_layers):
        outs = []
        for d in range(2):
            idx = 2 * layer + d
            wih, whh = params["w_ih_t"][idx], params["w_hh_t"][idx]
            bih, bhh = params["b_ih"][idx], params["b_hh"][idx]
            h = encoder_hidden[idx]
            gi = x @ wih + bih
            gh = h @ whh + bhh
            r = jax.nn.sigmoid(gi[:, :H] + gh[:, :H])
            z = jax.nn.sigmoid(gi[:, H:2 * H] + gh[:, H:2 * H])
            n = jnp.tanh(gi[:, 2 * H:] + r * gh[:, 2 * H:])
            h_new = (1.0 - z) * n + z * h
            outs.append(h_new)
            new_hidden.append(h_new)
        x = jnp.concatenate(outs, axis=-1)
    pred = x @ params["fc_w_t"] + params["fc_b"]
    return pred, jnp.stack(new_hidden, axis=0)


def decoder_forward_ref_steps(params, ids_tb, encoder_hidden, n_layers, hidden_size):
    h = encoder_hidden
    preds = []
    for t in range(ids_tb.shape[0]):
        p, h = decoder_forward_ref(params, ids_tb[t], h, n_layers, hidden_size)
        preds.append(p)
    return jnp.stack(preds, axis=0), h


# ---------------- Main ----------------

if __name__ == "__main__":
    OUTPUT_SIZE = 32   # vocab
    EMBED_SIZE = 16
    HIDDEN_SIZE = 32
    N_LAYERS = 2
    BATCH = 8
    STEPS = 4

    key = jax.random.PRNGKey(0)
    k_par, k_inp, k_hid, k_seq = jax.random.split(key, 4)

    params = init_params(k_par, OUTPUT_SIZE, EMBED_SIZE, HIDDEN_SIZE, N_LAYERS)
    packed = pack_params(params, OUTPUT_SIZE, EMBED_SIZE, HIDDEN_SIZE, N_LAYERS)

    input_ids = jax.random.randint(k_inp, (BATCH,), 0, OUTPUT_SIZE, dtype=jnp.int32)
    encoder_hidden = jax.random.normal(
        k_hid, (N_LAYERS * 2, BATCH, HIDDEN_SIZE), jnp.float32)

    # --- single-step forward (exactly Decoder.forward) ---
    pred, hidden = decoder_forward_pallas(packed, input_ids, encoder_hidden)
    pred = jax.block_until_ready(pred)
    hidden = jax.block_until_ready(hidden)

    pred_ref, hidden_ref = decoder_forward_ref(
        params, input_ids, encoder_hidden, N_LAYERS, HIDDEN_SIZE)

    assert pred.shape == (BATCH, OUTPUT_SIZE)
    assert hidden.shape == (N_LAYERS * 2, BATCH, HIDDEN_SIZE)
    assert jnp.allclose(pred, pred_ref, atol=5e-2, rtol=5e-2)
    assert jnp.allclose(hidden, hidden_ref, atol=5e-2, rtol=5e-2)

    # --- multi-step fused decode (weight DMA amortized over STEPS tokens) ---
    ids_seq = jax.random.randint(k_seq, (STEPS, BATCH), 0, OUTPUT_SIZE, dtype=jnp.int32)
    preds_s, hidden_s = decoder_forward_pallas_steps(packed, ids_seq, encoder_hidden)
    preds_s = jax.block_until_ready(preds_s)
    hidden_s = jax.block_until_ready(hidden_s)

    preds_ref_s, hidden_ref_s = decoder_forward_ref_steps(
        params, ids_seq, encoder_hidden, N_LAYERS, HIDDEN_SIZE)

    assert preds_s.shape == (STEPS, BATCH, OUTPUT_SIZE)
    assert hidden_s.shape == (N_LAYERS * 2, BATCH, HIDDEN_SIZE)
    assert jnp.allclose(preds_s, preds_ref_s, atol=5e-2, rtol=5e-2)
    assert jnp.allclose(hidden_s, hidden_ref_s, atol=5e-2, rtol=5e-2)

    print("KERNEL_OK")
</pallas_src>

<mosaic_0001>
module attributes {stable_mosaic.version = 11 : i64} {
  func.func @kernel(%arg0: memref<1x8xi32, #tpu.memory_space<smem>>, %arg1: memref<32x16xf32, #tpu.memory_space<any>>, %arg2: memref<4x8x32xf32, #tpu.memory_space<vmem>>, %arg3: memref<16x768xbf16, #tpu.memory_space<vmem>>, %arg4: memref<64x768xbf16, #tpu.memory_space<vmem>>, %arg5: memref<1x768xf32, #tpu.memory_space<vmem>>, %arg6: memref<1x768xf32, #tpu.memory_space<vmem>>, %arg7: memref<32x384xbf16, #tpu.memory_space<vmem>>, %arg8: memref<32x384xbf16, #tpu.memory_space<vmem>>, %arg9: memref<32x384xbf16, #tpu.memory_space<vmem>>, %arg10: memref<32x384xbf16, #tpu.memory_space<vmem>>, %arg11: memref<1x32xf32, #tpu.memory_space<vmem>>, %arg12: memref<1x32xf32, #tpu.memory_space<vmem>>, %arg13: memref<1x32xf32, #tpu.memory_space<vmem>>, %arg14: memref<1x32xf32, #tpu.memory_space<vmem>>, %arg15: memref<64x32xbf16, #tpu.memory_space<vmem>>, %arg16: memref<1x32xf32, #tpu.memory_space<vmem>>, %arg17: memref<8x32xf32, #tpu.memory_space<vmem>>, %arg18: memref<4x8x32xf32, #tpu.memory_space<vmem>>, %arg19: memref<8x16xf32, #tpu.memory_space<vmem>>, %arg20: memref<8x!tpu.dma_semaphore, #tpu.memory_space<semaphore_mem>>) attributes {dimension_semantics = [], scalar_prefetch = 0 : i64, scratch_operands = 2 : i64, tpu.core_type = #tpu.core_type<tc>} {
    %c0 = arith.constant 0 : index
    %c0_0 = arith.constant 0 : index
    %c0_1 = arith.constant 0 : index
    %0 = vector.load %arg2[%c0, %c0_0, %c0_1] : memref<4x8x32xf32, #tpu.memory_space<vmem>>, vector<1x8x32xf32>
    %1 = vector.shape_cast %0 : vector<1x8x32xf32> to vector<8x32xf32>
    %c1 = arith.constant 1 : index
    %c0_2 = arith.constant 0 : index
    %c0_3 = arith.constant 0 : index
    %2 = vector.load %arg2[%c1, %c0_2, %c0_3] : memref<4x8x32xf32, #tpu.memory_space<vmem>>, vector<1x8x32xf32>
    %3 = vector.shape_cast %2 : vector<1x8x32xf32> to vector<8x32xf32>
    %c2 = arith.constant 2 : index
    %c0_4 = arith.constant 0 : index
    %c0_5 = arith.constant 0 : index
    %4 = vector.load %arg2[%c2, %c0_4, %c0_5] : memref<4x8x32xf32, #tpu.memory_space<vmem>>, vector<1x8x32xf32>
    %5 = vector.shape_cast %4 : vector<1x8x32xf32> to vector<8x32xf32>
    %c3 = arith.constant 3 : index
    %c0_6 = arith.constant 0 : index
    %c0_7 = arith.constant 0 : index
    %6 = vector.load %arg2[%c3, %c0_6, %c0_7] : memref<4x8x32xf32, #tpu.memory_space<vmem>>, vector<1x8x32xf32>
    %7 = vector.shape_cast %6 : vector<1x8x32xf32> to vector<8x32xf32>
    %c0_8 = arith.constant 0 : index
    %c0_9 = arith.constant 0 : index
    %8 = memref.load %arg0[%c0_8, %c0_9] : memref<1x8xi32, #tpu.memory_space<smem>>
    %c0_i32 = arith.constant 0 : i32
    %c31_i32 = arith.constant 31 : i32
    %9 = arith.maxsi %c0_i32, %8 : i32
    %10 = arith.minsi %c31_i32, %9 : i32
    %c0_i32_10 = arith.constant 0 : i32
    %c0_i32_11 = arith.constant 0 : i32
    %11 = tpu.memref_slice %arg1[%10, %c0_i32_11] : memref<32x16xf32, #tpu.memory_space<any>> -> memref<1x16xf32, #tpu.memory_space<any>>
    %c0_i32_12 = arith.constant 0 : i32
    %c0_i32_13 = arith.constant 0 : i32
    %12 = tpu.memref_slice %arg19[%c0_i32_12, %c0_i32_13] : memref<8x16xf32, #tpu.memory_space<vmem>> -> memref<1x16xf32, #tpu.memory_space<vmem>>
    %13 = tpu.memref_slice %arg20[%c0_i32_10] : memref<8x!tpu.dma_semaphore, #tpu.memory_space<semaphore_mem>> -> memref<1x!tpu.dma_semaphore, #tpu.memory_space<semaphore_mem>>
    %14 = tpu.memref_squeeze %13 : memref<1x!tpu.dma_semaphore, #tpu.memory_space<semaphore_mem>> -> memref<!tpu.dma_semaphore, #tpu.memory_space<semaphore_mem>>
    tpu.enqueue_dma source(%11 : memref<1x16xf32, #tpu.memory_space<any>>) target(%12 : memref<1x16xf32, #tpu.memory_space<vmem>>) target_semaphore(%14 : memref<!tpu.dma_semaphore, #tpu.memory_space<semaphore_mem>>)
    %c0_14 = arith.constant 0 : index
    %c1_15 = arith.constant 1 : index
    %15 = memref.load %arg0[%c0_14, %c1_15] : memref<1x8xi32, #tpu.memory_space<smem>>
    %c0_i32_16 = arith.constant 0 : i32
    %c31_i32_17 = arith.constant 31 : i32
    %16 = arith.maxsi %c0_i32_16, %15 : i32
    %17 = arith.minsi %c31_i32_17, %16 : i32
    %c1_i32 = arith.constant 1 : i32
    %c0_i32_18 = arith.constant 0 : i32
    %18 = tpu.memref_slice %arg1[%17, %c0_i32_18] : memref<32x16xf32, #tpu.memory_space<any>> -> memref<1x16xf32, #tpu.memory_space<any>>
    %c1_i32_19 = arith.constant 1 : i32
    %c0_i32_20 = arith.constant 0 : i32
    %19 = tpu.memref_slice %arg19[%c1_i32_19, %c0_i32_20] : memref<8x16xf32, #tpu.memory_space<vmem>> -> memref<1x16xf32, #tpu.memory_space<vmem>>
    %20 = tpu.memref_slice %arg20[%c1_i32] : memref<8x!tpu.dma_semaphore, #tpu.memory_space<semaphore_mem>> -> memref<1x!tpu.dma_semaphore, #tpu.memory_space<semaphore_mem>>
    %21 = tpu.memref_squeeze %20 : memref<1x!tpu.dma_semaphore, #tpu.memory_space<semaphore_mem>> -> memref<!tpu.dma_semaphore, #tpu.memory_space<semaphore_mem>>
    tpu.enqueue_dma source(%18 : memref<1x16xf32, #tpu.memory_space<any>>) target(%19 : memref<1x16xf32, #tpu.memory_space<vmem>>) target_semaphore(%21 : memref<!tpu.dma_semaphore, #tpu.memory_space<semaphore_mem>>)
    %c0_21 = arith.constant 0 : index
    %c2_22 = arith.constant 2 : index
    %22 = memref.load %arg0[%c0_21, %c2_22] : memref<1x8xi32, #tpu.memory_space<smem>>
    %c0_i32_23 = arith.constant 0 : i32
    %c31_i32_24 = arith.constant 31 : i32
    %23 = arith.maxsi %c0_i32_23, %22 : i32
    %24 = arith.minsi %c31_i32_24, %23 : i32
    %c2_i32 = arith.constant 2 : i32
    %c0_i32_25 = arith.constant 0 : i32
    %25 = tpu.memref_slice %arg1[%24, %c0_i32_25] : memref<32x16xf32, #tpu.memory_space<any>> -> memref<1x16xf32, #tpu.memory_space<any>>
    %c2_i32_26 = arith.constant 2 : i32
    %c0_i32_27 = arith.constant 0 : i32
    %26 = tpu.memref_slice %arg19[%c2_i32_26, %c0_i32_27] : memref<8x16xf32, #tpu.memory_space<vmem>> -> memref<1x16xf32, #tpu.memory_space<vmem>>
    %27 = tpu.memref_slice %arg20[%c2_i32] : memref<8x!tpu.dma_semaphore, #tpu.memory_space<semaphore_mem>> -> memref<1x!tpu.dma_semaphore, #tpu.memory_space<semaphore_mem>>
    %28 = tpu.memref_squeeze %27 : memref<1x!tpu.dma_semaphore, #tpu.memory_space<semaphore_mem>> -> memref<!tpu.dma_semaphore, #tpu.memory_space<semaphore_mem>>
    tpu.enqueue_dma source(%25 : memref<1x16xf32, #tpu.memory_space<any>>) target(%26 : memref<1x16xf32, #tpu.memory_space<vmem>>) target_semaphore(%28 : memref<!tpu.dma_semaphore, #tpu.memory_space<semaphore_mem>>)
    %c0_28 = arith.constant 0 : index
    %c3_29 = arith.constant 3 : index
    %29 = memref.load %arg0[%c0_28, %c3_29] : memref<1x8xi32, #tpu.memory_space<smem>>
    %c0_i32_30 = arith.constant 0 : i32
    %c31_i32_31 = arith.constant 31 : i32
    %30 = arith.maxsi %c0_i32_30, %29 : i32
    %31 = arith.minsi %c31_i32_31, %30 : i32
    %c3_i32 = arith.constant 3 : i32
    %c0_i32_32 = arith.constant 0 : i32
    %32 = tpu.memref_slice %arg1[%31, %c0_i32_32] : memref<32x16xf32, #tpu.memory_space<any>> -> memref<1x16xf32, #tpu.memory_space<any>>
    %c3_i32_33 = arith.constant 3 : i32
    %c0_i32_34 = arith.constant 0 : i32
    %33 = tpu.memref_slice %arg19[%c3_i32_33, %c0_i32_34] : memref<8x16xf32, #tpu.memory_space<vmem>> -> memref<1x16xf32, #tpu.memory_space<vmem>>
    %34 = tpu.memref_slice %arg20[%c3_i32] : memref<8x!tpu.dma_semaphore, #tpu.memory_space<semaphore_mem>> -> memref<1x!tpu.dma_semaphore, #tpu.memory_space<semaphore_mem>>
    %35 = tpu.memref_squeeze %34 : memref<1x!tpu.dma_semaphore, #tpu.memory_space<semaphore_mem>> -> memref<!tpu.dma_semaphore, #tpu.memory_space<semaphore_mem>>
    tpu.enqueue_dma source(%32 : memref<1x16xf32, #tpu.memory_space<any>>) target(%33 : memref<1x16xf32, #tpu.memory_space<vmem>>) target_semaphore(%35 : memref<!tpu.dma_semaphore, #tpu.memory_space<semaphore_mem>>)
    %c0_35 = arith.constant 0 : index
    %c4 = arith.constant 4 : index
    %36 = memref.load %arg0[%c0_35, %c4] : memref<1x8xi32, #tpu.memory_space<smem>>
    %c0_i32_36 = arith.constant 0 : i32
    %c31_i32_37 = arith.constant 31 : i32
    %37 = arith.maxsi %c0_i32_36, %36 : i32
    %38 = arith.minsi %c31_i32_37, %37 : i32
    %c4_i32 = arith.constant 4 : i32
    %c0_i32_38 = arith.constant 0 : i32
    %39 = tpu.memref_slice %arg1[%38, %c0_i32_38] : memref<32x16xf32, #tpu.memory_space<any>> -> memref<1x16xf32, #tpu.memory_space<any>>
    %c4_i32_39 = arith.constant 4 : i32
    %c0_i32_40 = arith.constant 0 : i32
    %40 = tpu.memref_slice %arg19[%c4_i32_39, %c0_i32_40] : memref<8x16xf32, #tpu.memory_space<vmem>> -> memref<1x16xf32, #tpu.memory_space<vmem>>
    %41 = tpu.memref_slice %arg20[%c4_i32] : memref<8x!tpu.dma_semaphore, #tpu.memory_space<semaphore_mem>> -> memref<1x!tpu.dma_semaphore, #tpu.memory_space<semaphore_mem>>
    %42 = tpu.memref_squeeze %41 : memref<1x!tpu.dma_semaphore, #tpu.memory_space<semaphore_mem>> -> memref<!tpu.dma_semaphore, #tpu.memory_space<semaphore_mem>>
    tpu.enqueue_dma source(%39 : memref<1x16xf32, #tpu.memory_space<any>>) target(%40 : memref<1x16xf32, #tpu.memory_space<vmem>>) target_semaphore(%42 : memref<!tpu.dma_semaphore, #tpu.memory_space<semaphore_mem>>)
    %c0_41 = arith.constant 0 : index
    %c5 = arith.constant 5 : index
    %43 = memref.load %arg0[%c0_41, %c5] : memref<1x8xi32, #tpu.memory_space<smem>>
    %c0_i32_42 = arith.constant 0 : i32
    %c31_i32_43 = arith.constant 31 : i32
    %44 = arith.maxsi %c0_i32_42, %43 : i32
    %45 = arith.minsi %c31_i32_43, %44 : i32
    %c5_i32 = arith.constant 5 : i32
    %c0_i32_44 = arith.constant 0 : i32
    %46 = tpu.memref_slice %arg1[%45, %c0_i32_44] : memref<32x16xf32, #tpu.memory_space<any>> -> memref<1x16xf32, #tpu.memory_space<any>>
    %c5_i32_45 = arith.constant 5 : i32
    %c0_i32_46 = arith.constant 0 : i32
    %47 = tpu.memref_slice %arg19[%c5_i32_45, %c0_i32_46] : memref<8x16xf32, #tpu.memory_space<vmem>> -> memref<1x16xf32, #tpu.memory_space<vmem>>
    %48 = tpu.memref_slice %arg20[%c5_i32] : memref<8x!tpu.dma_semaphore, #tpu.memory_space<semaphore_mem>> -> memref<1x!tpu.dma_semaphore, #tpu.memory_space<semaphore_mem>>
    %49 = tpu.memref_squeeze %48 : memref<1x!tpu.dma_semaphore, #tpu.memory_space<semaphore_mem>> -> memref<!tpu.dma_semaphore, #tpu.memory_space<semaphore_mem>>
    tpu.enqueue_dma source(%46 : memref<1x16xf32, #tpu.memory_space<any>>) target(%47 : memref<1x16xf32, #tpu.memory_space<vmem>>) target_semaphore(%49 : memref<!tpu.dma_semaphore, #tpu.memory_space<semaphore_mem>>)
    %c0_47 = arith.constant 0 : index
    %c6 = arith.constant 6 : index
    %50 = memref.load %arg0[%c0_47, %c6] : memref<1x8xi32, #tpu.memory_space<smem>>
    %c0_i32_48 = arith.constant 0 : i32
    %c31_i32_49 = arith.constant 31 : i32
    %51 = arith.maxsi %c0_i32_48, %50 : i32
    %52 = arith.minsi %c31_i32_49, %51 : i32
    %c6_i32 = arith.constant 6 : i32
    %c0_i32_50 = arith.constant 0 : i32
    %53 = tpu.memref_slice %arg1[%52, %c0_i32_50] : memref<32x16xf32, #tpu.memory_space<any>> -> memref<1x16xf32, #tpu.memory_space<any>>
    %c6_i32_51 = arith.constant 6 : i32
    %c0_i32_52 = arith.constant 0 : i32
    %54 = tpu.memref_slice %arg19[%c6_i32_51, %c0_i32_52] : memref<8x16xf32, #tpu.memory_space<vmem>> -> memref<1x16xf32, #tpu.memory_space<vmem>>
    %55 = tpu.memref_slice %arg20[%c6_i32] : memref<8x!tpu.dma_semaphore, #tpu.memory_space<semaphore_mem>> -> memref<1x!tpu.dma_semaphore, #tpu.memory_space<semaphore_mem>>
    %56 = tpu.memref_squeeze %55 : memref<1x!tpu.dma_semaphore, #tpu.memory_space<semaphore_mem>> -> memref<!tpu.dma_semaphore, #tpu.memory_space<semaphore_mem>>
    tpu.enqueue_dma source(%53 : memref<1x16xf32, #tpu.memory_space<any>>) target(%54 : memref<1x16xf32, #tpu.memory_space<vmem>>) target_semaphore(%56 : memref<!tpu.dma_semaphore, #tpu.memory_space<semaphore_mem>>)
    %c0_53 = arith.constant 0 : index
    %c7 = arith.constant 7 : index
    %57 = memref.load %arg0[%c0_53, %c7] : memref<1x8xi32, #tpu.memory_space<smem>>
    %c0_i32_54 = arith.constant 0 : i32
    %c31_i32_55 = arith.constant 31 : i32
    %58 = arith.maxsi %c0_i32_54, %57 : i32
    %59 = arith.minsi %c31_i32_55, %58 : i32
    %c7_i32 = arith.constant 7 : i32
    %c0_i32_56 = arith.constant 0 : i32
    %60 = tpu.memref_slice %arg1[%59, %c0_i32_56] : memref<32x16xf32, #tpu.memory_space<any>> -> memref<1x16xf32, #tpu.memory_space<any>>
    %c7_i32_57 = arith.constant 7 : i32
    %c0_i32_58 = arith.constant 0 : i32
    %61 = tpu.memref_slice %arg19[%c7_i32_57, %c0_i32_58] : memref<8x16xf32, #tpu.memory_space<vmem>> -> memref<1x16xf32, #tpu.memory_space<vmem>>
    %62 = tpu.memref_slice %arg20[%c7_i32] : memref<8x!tpu.dma_semaphore, #tpu.memory_space<semaphore_mem>> -> memref<1x!tpu.dma_semaphore, #tpu.memory_space<semaphore_mem>>
    %63 = tpu.memref_squeeze %62 : memref<1x!tpu.dma_semaphore, #tpu.memory_space<semaphore_mem>> -> memref<!tpu.dma_semaphore, #tpu.memory_space<semaphore_mem>>
    tpu.enqueue_dma source(%60 : memref<1x16xf32, #tpu.memory_space<any>>) target(%61 : memref<1x16xf32, #tpu.memory_space<vmem>>) target_semaphore(%63 : memref<!tpu.dma_semaphore, #tpu.memory_space<semaphore_mem>>)
    %c0_i32_59 = arith.constant 0 : i32
    %c0_i32_60 = arith.constant 0 : i32
    %64 = tpu.memref_slice %arg1[%10, %c0_i32_60] : memref<32x16xf32, #tpu.memory_space<any>> -> memref<1x16xf32, #tpu.memory_space<any>>
    %c0_i32_61 = arith.constant 0 : i32
    %c0_i32_62 = arith.constant 0 : i32
    %65 = tpu.memref_slice %arg19[%c0_i32_61, %c0_i32_62] : memref<8x16xf32, #tpu.memory_space<vmem>> -> memref<1x16xf32, #tpu.memory_space<vmem>>
    %66 = tpu.memref_slice %arg20[%c0_i32_59] : memref<8x!tpu.dma_semaphore, #tpu.memory_space<semaphore_mem>> -> memref<1x!tpu.dma_semaphore, #tpu.memory_space<semaphore_mem>>
    %67 = tpu.memref_squeeze %66 : memref<1x!tpu.dma_semaphore, #tpu.memory_space<semaphore_mem>> -> memref<!tpu.dma_semaphore, #tpu.memory_space<semaphore_mem>>
    tpu.wait_dma2 semaphore(%67 : memref<!tpu.dma_semaphore, #tpu.memory_space<semaphore_mem>>) src(%64 : memref<1x16xf32, #tpu.memory_space<any>>) dst(%65 : memref<1x16xf32, #tpu.memory_space<vmem>>)
    %c1_i32_63 = arith.constant 1 : i32
    %c0_i32_64 = arith.constant 0 : i32
    %68 = tpu.memref_slice %arg1[%17, %c0_i32_64] : memref<32x16xf32, #tpu.memory_space<any>> -> memref<1x16xf32, #tpu.memory_space<any>>
    %c1_i32_65 = arith.constant 1 : i32
    %c0_i32_66 = arith.constant 0 : i32
    %69 = tpu.memref_slice %arg19[%c1_i32_65, %c0_i32_66] : memref<8x16xf32, #tpu.memory_space<vmem>> -> memref<1x16xf32, #tpu.memory_space<vmem>>
    %70 = tpu.memref_slice %arg20[%c1_i32_63] : memref<8x!tpu.dma_semaphore, #tpu.memory_space<semaphore_mem>> -> memref<1x!tpu.dma_semaphore, #tpu.memory_space<semaphore_mem>>
    %71 = tpu.memref_squeeze %70 : memref<1x!tpu.dma_semaphore, #tpu.memory_space<semaphore_mem>> -> memref<!tpu.dma_semaphore, #tpu.memory_space<semaphore_mem>>
    tpu.wait_dma2 semaphore(%71 : memref<!tpu.dma_semaphore, #tpu.memory_space<semaphore_mem>>) src(%68 : memref<1x16xf32, #tpu.memory_space<any>>) dst(%69 : memref<1x16xf32, #tpu.memory_space<vmem>>)
    %c2_i32_67 = arith.constant 2 : i32
    %c0_i32_68 = arith.constant 0 : i32
    %72 = tpu.memref_slice %arg1[%24, %c0_i32_68] : memref<32x16xf32, #tpu.memory_space<any>> -> memref<1x16xf32, #tpu.memory_space<any>>
    %c2_i32_69 = arith.constant 2 : i32
    %c0_i32_70 = arith.constant 0 : i32
    %73 = tpu.memref_slice %arg19[%c2_i32_69, %c0_i32_70] : memref<8x16xf32, #tpu.memory_space<vmem>> -> memref<1x16xf32, #tpu.memory_space<vmem>>
    %74 = tpu.memref_slice %arg20[%c2_i32_67] : memref<8x!tpu.dma_semaphore, #tpu.memory_space<semaphore_mem>> -> memref<1x!tpu.dma_semaphore, #tpu.memory_space<semaphore_mem>>
    %75 = tpu.memref_squeeze %74 : memref<1x!tpu.dma_semaphore, #tpu.memory_space<semaphore_mem>> -> memref<!tpu.dma_semaphore, #tpu.memory_space<semaphore_mem>>
    tpu.wait_dma2 semaphore(%75 : memref<!tpu.dma_semaphore, #tpu.memory_space<semaphore_mem>>) src(%72 : memref<1x16xf32, #tpu.memory_space<any>>) dst(%73 : memref<1x16xf32, #tpu.memory_space<vmem>>)
    %c3_i32_71 = arith.constant 3 : i32
    %c0_i32_72 = arith.constant 0 : i32
    %76 = tpu.memref_slice %arg1[%31, %c0_i32_72] : memref<32x16xf32, #tpu.memory_space<any>> -> memref<1x16xf32, #tpu.memory_space<any>>
    %c3_i32_73 = arith.constant 3 : i32
    %c0_i32_74 = arith.constant 0 : i32
    %77 = tpu.memref_slice %arg19[%c3_i32_73, %c0_i32_74] : memref<8x16xf32, #tpu.memory_space<vmem>> -> memref<1x16xf32, #tpu.memory_space<vmem>>
    %78 = tpu.memref_slice %arg20[%c3_i32_71] : memref<8x!tpu.dma_semaphore, #tpu.memory_space<semaphore_mem>> -> memref<1x!tpu.dma_semaphore, #tpu.memory_space<semaphore_mem>>
    %79 = tpu.memref_squeeze %78 : memref<1x!tpu.dma_semaphore, #tpu.memory_space<semaphore_mem>> -> memref<!tpu.dma_semaphore, #tpu.memory_space<semaphore_mem>>
    tpu.wait_dma2 semaphore(%79 : memref<!tpu.dma_semaphore, #tpu.memory_space<semaphore_mem>>) src(%76 : memref<1x16xf32, #tpu.memory_space<any>>) dst(%77 : memref<1x16xf32, #tpu.memory_space<vmem>>)
    %c4_i32_75 = arith.constant 4 : i32
    %c0_i32_76 = arith.constant 0 : i32
    %80 = tpu.memref_slice %arg1[%38, %c0_i32_76] : memref<32x16xf32, #tpu.memory_space<any>> -> memref<1x16xf32, #tpu.memory_space<any>>
    %c4_i32_77 = arith.constant 4 : i32
    %c0_i32_78 = arith.constant 0 : i32
    %81 = tpu.memref_slice %arg19[%c4_i32_77, %c0_i32_78] : memref<8x16xf32, #tpu.memory_space<vmem>> -> memref<1x16xf32, #tpu.memory_space<vmem>>
    %82 = tpu.memref_slice %arg20[%c4_i32_75] : memref<8x!tpu.dma_semaphore, #tpu.memory_space<semaphore_mem>> -> memref<1x!tpu.dma_semaphore, #tpu.memory_space<semaphore_mem>>
    %83 = tpu.memref_squeeze %82 : memref<1x!tpu.dma_semaphore, #tpu.memory_space<semaphore_mem>> -> memref<!tpu.dma_semaphore, #tpu.memory_space<semaphore_mem>>
    tpu.wait_dma2 semaphore(%83 : memref<!tpu.dma_semaphore, #tpu.memory_space<semaphore_mem>>) src(%80 : memref<1x16xf32, #tpu.memory_space<any>>) dst(%81 : memref<1x16xf32, #tpu.memory_space<vmem>>)
    %c5_i32_79 = arith.constant 5 : i32
    %c0_i32_80 = arith.constant 0 : i32
    %84 = tpu.memref_slice %arg1[%45, %c0_i32_80] : memref<32x16xf32, #tpu.memory_space<any>> -> memref<1x16xf32, #tpu.memory_space<any>>
    %c5_i32_81 = arith.constant 5 : i32
    %c0_i32_82 = arith.constant 0 : i32
    %85 = tpu.memref_slice %arg19[%c5_i32_81, %c0_i32_82] : memref<8x16xf32, #tpu.memory_space<vmem>> -> memref<1x16xf32, #tpu.memory_space<vmem>>
    %86 = tpu.memref_slice %arg20[%c5_i32_79] : memref<8x!tpu.dma_semaphore, #tpu.memory_space<semaphore_mem>> -> memref<1x!tpu.dma_semaphore, #tpu.memory_space<semaphore_mem>>
    %87 = tpu.memref_squeeze %86 : memref<1x!tpu.dma_semaphore, #tpu.memory_space<semaphore_mem>> -> memref<!tpu.dma_semaphore, #tpu.memory_space<semaphore_mem>>
    tpu.wait_dma2 semaphore(%87 : memref<!tpu.dma_semaphore, #tpu.memory_space<semaphore_mem>>) src(%84 : memref<1x16xf32, #tpu.memory_space<any>>) dst(%85 : memref<1x16xf32, #tpu.memory_space<vmem>>)
    %c6_i32_83 = arith.constant 6 : i32
    %c0_i32_84 = arith.constant 0 : i32
    %88 = tpu.memref_slice %arg1[%52, %c0_i32_84] : memref<32x16xf32, #tpu.memory_space<any>> -> memref<1x16xf32, #tpu.memory_space<any>>
    %c6_i32_85 = arith.constant 6 : i32
    %c0_i32_86 = arith.constant 0 : i32
    %89 = tpu.memref_slice %arg19[%c6_i32_85, %c0_i32_86] : memref<8x16xf32, #tpu.memory_space<vmem>> -> memref<1x16xf32, #tpu.memory_space<vmem>>
    %90 = tpu.memref_slice %arg20[%c6_i32_83] : memref<8x!tpu.dma_semaphore, #tpu.memory_space<semaphore_mem>> -> memref<1x!tpu.dma_semaphore, #tpu.memory_space<semaphore_mem>>
    %91 = tpu.memref_squeeze %90 : memref<1x!tpu.dma_semaphore, #tpu.memory_space<semaphore_mem>> -> memref<!tpu.dma_semaphore, #tpu.memory_space<semaphore_mem>>
    tpu.wait_dma2 semaphore(%91 : memref<!tpu.dma_semaphore, #tpu.memory_space<semaphore_mem>>) src(%88 : memref<1x16xf32, #tpu.memory_space<any>>) dst(%89 : memref<1x16xf32, #tpu.memory_space<vmem>>)
    %c7_i32_87 = arith.constant 7 : i32
    %c0_i32_88 = arith.constant 0 : i32
    %92 = tpu.memref_slice %arg1[%59, %c0_i32_88] : memref<32x16xf32, #tpu.memory_space<any>> -> memref<1x16xf32, #tpu.memory_space<any>>
    %c7_i32_89 = arith.constant 7 : i32
    %c0_i32_90 = arith.constant 0 : i32
    %93 = tpu.memref_slice %arg19[%c7_i32_89, %c0_i32_90] : memref<8x16xf32, #tpu.memory_space<vmem>> -> memref<1x16xf32, #tpu.memory_space<vmem>>
    %94 = tpu.memref_slice %arg20[%c7_i32_87] : memref<8x!tpu.dma_semaphore, #tpu.memory_space<semaphore_mem>> -> memref<1x!tpu.dma_semaphore, #tpu.memory_space<semaphore_mem>>
    %95 = tpu.memref_squeeze %94 : memref<1x!tpu.dma_semaphore, #tpu.memory_space<semaphore_mem>> -> memref<!tpu.dma_semaphore, #tpu.memory_space<semaphore_mem>>
    tpu.wait_dma2 semaphore(%95 : memref<!tpu.dma_semaphore, #tpu.memory_space<semaphore_mem>>) src(%92 : memref<1x16xf32, #tpu.memory_space<any>>) dst(%93 : memref<1x16xf32, #tpu.memory_space<vmem>>)
    %c0_91 = arith.constant 0 : index
    %c0_92 = arith.constant 0 : index
    %96 = vector.load %arg19[%c0_91, %c0_92] : memref<8x16xf32, #tpu.memory_space<vmem>>, vector<8x16xf32>
    %97 = arith.truncf %96 : vector<8x16xf32> to vector<8x16xbf16>
    %c0_93 = arith.constant 0 : index
    %c0_94 = arith.constant 0 : index
    %98 = vector.load %arg3[%c0_93, %c0_94] : memref<16x768xbf16, #tpu.memory_space<vmem>>, vector<16x768xbf16>
    %cst = arith.constant dense<0.000000e+00> : vector<8x768xf32>
    %99 = tpu.matmul %97, %98, %cst {dimension_numbers = #tpu.dot_dimension_numbers<[1], [0], [0], [1], [0, 0, 1, 1], [], []>} : vector<8x16xbf16>, vector<16x768xbf16>, vector<8x768xf32> -> vector<8x768xf32>
    %c0_95 = arith.constant 0 : index
    %c0_96 = arith.constant 0 : index
    %100 = vector.load %arg5[%c0_95, %c0_96] : memref<1x768xf32, #tpu.memory_space<vmem>>, vector<1x768xf32>
    %101 = vector.broadcast %100 : vector<1x768xf32> to vector<8x768xf32>
    %102 = arith.addf %99, %101 : vector<8x768xf32>
    %103 = arith.truncf %1 : vector<8x32xf32> to vector<8x32xbf16>
    %c0_97 = arith.constant 0 : index
    %c0_98 = arith.constant 0 : index
    %104 = vector.load %arg7[%c0_97, %c0_98] : memref<32x384xbf16, #tpu.memory_space<vmem>>, vector<32x384xbf16>
    %cst_99 = arith.constant dense<0.000000e+00> : vector<8x384xf32>
    %105 = tpu.matmul %103, %104, %cst_99 {dimension_numbers = #tpu.dot_dimension_numbers<[1], [0], [0], [1], [0, 0, 1, 1], [], []>} : vector<8x32xbf16>, vector<32x384xbf16>, vector<8x384xf32> -> vector<8x384xf32>
    %106 = vector.extract_strided_slice %102 {offsets = [0, 0], sizes = [8, 32], strides = [1, 1]} : vector<8x768xf32> to vector<8x32xf32>
    %107 = vector.extract_strided_slice %105 {offsets = [0, 0], sizes = [8, 32], strides = [1, 1]} : vector<8x384xf32> to vector<8x32xf32>
    %108 = arith.addf %106, %107 : vector<8x32xf32>
    %109 = arith.negf %108 : vector<8x32xf32>
    %110 = math.exp %109 : vector<8x32xf32>
    %cst_100 = arith.constant 1.000000e+00 : f32
    %111 = vector.broadcast %cst_100 : f32 to vector<8x32xf32>
    %112 = arith.addf %111, %110 : vector<8x32xf32>
    %113 = arith.divf %111, %112 : vector<8x32xf32>
    %114 = vector.extract_strided_slice %102 {offsets = [0, 128], sizes = [8, 32], strides = [1, 1]} : vector<8x768xf32> to vector<8x32xf32>
    %115 = vector.extract_strided_slice %105 {offsets = [0, 128], sizes = [8, 32], strides = [1, 1]} : vector<8x384xf32> to vector<8x32xf32>
    %116 = arith.addf %114, %115 : vector<8x32xf32>
    %117 = arith.negf %116 : vector<8x32xf32>
    %118 = math.exp %117 : vector<8x32xf32>
    %cst_101 = arith.constant 1.000000e+00 : f32
    %119 = vector.broadcast %cst_101 : f32 to vector<8x32xf32>
    %120 = arith.addf %119, %118 : vector<8x32xf32>
    %121 = arith.divf %119, %120 : vector<8x32xf32>
    %122 = vector.extract_strided_slice %102 {offsets = [0, 256], sizes = [8, 32], strides = [1, 1]} : vector<8x768xf32> to vector<8x32xf32>
    %123 = vector.extract_strided_slice %105 {offsets = [0, 256], sizes = [8, 32], strides = [1, 1]} : vector<8x384xf32> to vector<8x32xf32>
    %c0_102 = arith.constant 0 : index
    %c0_103 = arith.constant 0 : index
    %124 = vector.load %arg11[%c0_102, %c0_103] : memref<1x32xf32, #tpu.memory_space<vmem>>, vector<1x32xf32>
    %125 = vector.broadcast %124 : vector<1x32xf32> to vector<8x32xf32>
    %126 = arith.addf %123, %125 : vector<8x32xf32>
    %127 = arith.mulf %113, %126 : vector<8x32xf32>
    %128 = arith.addf %122, %127 : vector<8x32xf32>
    %129 = math.tanh %128 : vector<8x32xf32>
    %cst_104 = arith.constant 1.000000e+00 : f32
    %130 = vector.broadcast %cst_104 : f32 to vector<8x32xf32>
    %131 = arith.subf %130, %121 : vector<8x32xf32>
    %132 = arith.mulf %131, %129 : vector<8x32xf32>
    %133 = arith.mulf %121, %1 : vector<8x32xf32>
    %134 = arith.addf %132, %133 : vector<8x32xf32>
    %135 = arith.truncf %3 : vector<8x32xf32> to vector<8x32xbf16>
    %c0_105 = arith.constant 0 : index
    %c0_106 = arith.constant 0 : index
    %136 = vector.load %arg8[%c0_105, %c0_106] : memref<32x384xbf16, #tpu.memory_space<vmem>>, vector<32x384xbf16>
    %cst_107 = arith.constant dense<0.000000e+00> : vector<8x384xf32>
    %137 = tpu.matmul %135, %136, %cst_107 {dimension_numbers = #tpu.dot_dimension_numbers<[1], [0], [0], [1], [0, 0, 1, 1], [], []>} : vector<8x32xbf16>, vector<32x384xbf16>, vector<8x384xf32> -> vector<8x384xf32>
    %138 = vector.extract_strided_slice %102 {offsets = [0, 384], sizes = [8, 32], strides = [1, 1]} : vector<8x768xf32> to vector<8x32xf32>
    %139 = vector.extract_strided_slice %137 {offsets = [0, 0], sizes = [8, 32], strides = [1, 1]} : vector<8x384xf32> to vector<8x32xf32>
    %140 = arith.addf %138, %139 : vector<8x32xf32>
    %141 = arith.negf %140 : vector<8x32xf32>
    %142 = math.exp %141 : vector<8x32xf32>
    %cst_108 = arith.constant 1.000000e+00 : f32
    %143 = vector.broadcast %cst_108 : f32 to vector<8x32xf32>
    %144 = arith.addf %143, %142 : vector<8x32xf32>
    %145 = arith.divf %143, %144 : vector<8x32xf32>
    %146 = vector.extract_strided_slice %102 {offsets = [0, 512], sizes = [8, 32], strides = [1, 1]} : vector<8x768xf32> to vector<8x32xf32>
    %147 = vector.extract_strided_slice %137 {offsets = [0, 128], sizes = [8, 32], strides = [1, 1]} : vector<8x384xf32> to vector<8x32xf32>
    %148 = arith.addf %146, %147 : vector<8x32xf32>
    %149 = arith.negf %148 : vector<8x32xf32>
    %150 = math.exp %149 : vector<8x32xf32>
    %cst_109 = arith.constant 1.000000e+00 : f32
    %151 = vector.broadcast %cst_109 : f32 to vector<8x32xf32>
    %152 = arith.addf %151, %150 : vector<8x32xf32>
    %153 = arith.divf %151, %152 : vector<8x32xf32>
    %154 = vector.extract_strided_slice %102 {offsets = [0, 640], sizes = [8, 32], strides = [1, 1]} : vector<8x768xf32> to vector<8x32xf32>
    %155 = vector.extract_strided_slice %137 {offsets = [0, 256], sizes = [8, 32], strides = [1, 1]} : vector<8x384xf32> to vector<8x32xf32>
    %c0_110 = arith.constant 0 : index
    %c0_111 = arith.constant 0 : index
    %156 = vector.load %arg12[%c0_110, %c0_111] : memref<1x32xf32, #tpu.memory_space<vmem>>, vector<1x32xf32>
    %157 = vector.broadcast %156 : vector<1x32xf32> to vector<8x32xf32>
    %158 = arith.addf %155, %157 : vector<8x32xf32>
    %159 = arith.mulf %145, %158 : vector<8x32xf32>
    %160 = arith.addf %154, %159 : vector<8x32xf32>
    %161 = math.tanh %160 : vector<8x32xf32>
    %cst_112 = arith.constant 1.000000e+00 : f32
    %162 = vector.broadcast %cst_112 : f32 to vector<8x32xf32>
    %163 = arith.subf %162, %153 : vector<8x32xf32>
    %164 = arith.mulf %163, %161 : vector<8x32xf32>
    %165 = arith.mulf %153, %3 : vector<8x32xf32>
    %166 = arith.addf %164, %165 : vector<8x32xf32>
    %167 = tpu.concatenate %134, %166 in 1 : vector<8x32xf32>, vector<8x32xf32> -> vector<8x64xf32>
    %168 = arith.truncf %167 : vector<8x64xf32> to vector<8x64xbf16>
    %c0_113 = arith.constant 0 : index
    %c0_114 = arith.constant 0 : index
    %169 = vector.load %arg4[%c0_113, %c0_114] : memref<64x768xbf16, #tpu.memory_space<vmem>>, vector<64x768xbf16>
    %cst_115 = arith.constant dense<0.000000e+00> : vector<8x768xf32>
    %170 = tpu.matmul %168, %169, %cst_115 {dimension_numbers = #tpu.dot_dimension_numbers<[1], [0], [0], [1], [0, 0, 1, 1], [], []>} : vector<8x64xbf16>, vector<64x768xbf16>, vector<8x768xf32> -> vector<8x768xf32>
    %c0_116 = arith.constant 0 : index
    %c0_117 = arith.constant 0 : index
    %171 = vector.load %arg6[%c0_116, %c0_117] : memref<1x768xf32, #tpu.memory_space<vmem>>, vector<1x768xf32>
    %172 = vector.broadcast %171 : vector<1x768xf32> to vector<8x768xf32>
    %173 = arith.addf %170, %172 : vector<8x768xf32>
    %174 = arith.truncf %5 : vector<8x32xf32> to vector<8x32xbf16>
    %c0_118 = arith.constant 0 : index
    %c0_119 = arith.constant 0 : index
    %175 = vector.load %arg9[%c0_118, %c0_119] : memref<32x384xbf16, #tpu.memory_space<vmem>>, vector<32x384xbf16>
    %cst_120 = arith.constant dense<0.000000e+00> : vector<8x384xf32>
    %176 = tpu.matmul %174, %175, %cst_120 {dimension_numbers = #tpu.dot_dimension_numbers<[1], [0], [0], [1], [0, 0, 1, 1], [], []>} : vector<8x32xbf16>, vector<32x384xbf16>, vector<8x384xf32> -> vector<8x384xf32>
    %177 = vector.extract_strided_slice %173 {offsets = [0, 0], sizes = [8, 32], strides = [1, 1]} : vector<8x768xf32> to vector<8x32xf32>
    %178 = vector.extract_strided_slice %176 {offsets = [0, 0], sizes = [8, 32], strides = [1, 1]} : vector<8x384xf32> to vector<8x32xf32>
    %179 = arith.addf %177, %178 : vector<8x32xf32>
    %180 = arith.negf %179 : vector<8x32xf32>
    %181 = math.exp %180 : vector<8x32xf32>
    %cst_121 = arith.constant 1.000000e+00 : f32
    %182 = vector.broadcast %cst_121 : f32 to vector<8x32xf32>
    %183 = arith.addf %182, %181 : vector<8x32xf32>
    %184 = arith.divf %182, %183 : vector<8x32xf32>
    %185 = vector.extract_strided_slice %173 {offsets = [0, 128], sizes = [8, 32], strides = [1, 1]} : vector<8x768xf32> to vector<8x32xf32>
    %186 = vector.extract_strided_slice %176 {offsets = [0, 128], sizes = [8, 32], strides = [1, 1]} : vector<8x384xf32> to vector<8x32xf32>
    %187 = arith.addf %185, %186 : vector<8x32xf32>
    %188 = arith.negf %187 : vector<8x32xf32>
    %189 = math.exp %188 : vector<8x32xf32>
    %cst_122 = arith.constant 1.000000e+00 : f32
    %190 = vector.broadcast %cst_122 : f32 to vector<8x32xf32>
    %191 = arith.addf %190, %189 : vector<8x32xf32>
    %192 = arith.divf %190, %191 : vector<8x32xf32>
    %193 = vector.extract_strided_slice %173 {offsets = [0, 256], sizes = [8, 32], strides = [1, 1]} : vector<8x768xf32> to vector<8x32xf32>
    %194 = vector.extract_strided_slice %176 {offsets = [0, 256], sizes = [8, 32], strides = [1, 1]} : vector<8x384xf32> to vector<8x32xf32>
    %c0_123 = arith.constant 0 : index
    %c0_124 = arith.constant 0 : index
    %195 = vector.load %arg13[%c0_123, %c0_124] : memref<1x32xf32, #tpu.memory_space<vmem>>, vector<1x32xf32>
    %196 = vector.broadcast %195 : vector<1x32xf32> to vector<8x32xf32>
    %197 = arith.addf %194, %196 : vector<8x32xf32>
    %198 = arith.mulf %184, %197 : vector<8x32xf32>
    %199 = arith.addf %193, %198 : vector<8x32xf32>
    %200 = math.tanh %199 : vector<8x32xf32>
    %cst_125 = arith.constant 1.000000e+00 : f32
    %201 = vector.broadcast %cst_125 : f32 to vector<8x32xf32>
    %202 = arith.subf %201, %192 : vector<8x32xf32>
    %203 = arith.mulf %202, %200 : vector<8x32xf32>
    %204 = arith.mulf %192, %5 : vector<8x32xf32>
    %205 = arith.addf %203, %204 : vector<8x32xf32>
    %206 = arith.truncf %7 : vector<8x32xf32> to vector<8x32xbf16>
    %c0_126 = arith.constant 0 : index
    %c0_127 = arith.constant 0 : index
    %207 = vector.load %arg10[%c0_126, %c0_127] : memref<32x384xbf16, #tpu.memory_space<vmem>>, vector<32x384xbf16>
    %cst_128 = arith.constant dense<0.000000e+00> : vector<8x384xf32>
    %208 = tpu.matmul %206, %207, %cst_128 {dimension_numbers = #tpu.dot_dimension_numbers<[1], [0], [0], [1], [0, 0, 1, 1], [], []>} : vector<8x32xbf16>, vector<32x384xbf16>, vector<8x384xf32> -> vector<8x384xf32>
    %209 = vector.extract_strided_slice %173 {offsets = [0, 384], sizes = [8, 32], strides = [1, 1]} : vector<8x768xf32> to vector<8x32xf32>
    %210 = vector.extract_strided_slice %208 {offsets = [0, 0], sizes = [8, 32], strides = [1, 1]} : vector<8x384xf32> to vector<8x32xf32>
    %211 = arith.addf %209, %210 : vector<8x32xf32>
    %212 = arith.negf %211 : vector<8x32xf32>
    %213 = math.exp %212 : vector<8x32xf32>
    %cst_129 = arith.constant 1.000000e+00 : f32
    %214 = vector.broadcast %cst_129 : f32 to vector<8x32xf32>
    %215 = arith.addf %214, %213 : vector<8x32xf32>
    %216 = arith.divf %214, %215 : vector<8x32xf32>
    %217 = vector.extract_strided_slice %173 {offsets = [0, 512], sizes = [8, 32], strides = [1, 1]} : vector<8x768xf32> to vector<8x32xf32>
    %218 = vector.extract_strided_slice %208 {offsets = [0, 128], sizes = [8, 32], strides = [1, 1]} : vector<8x384xf32> to vector<8x32xf32>
    %219 = arith.addf %217, %218 : vector<8x32xf32>
    %220 = arith.negf %219 : vector<8x32xf32>
    %221 = math.exp %220 : vector<8x32xf32>
    %cst_130 = arith.constant 1.000000e+00 : f32
    %222 = vector.broadcast %cst_130 : f32 to vector<8x32xf32>
    %223 = arith.addf %222, %221 : vector<8x32xf32>
    %224 = arith.divf %222, %223 : vector<8x32xf32>
    %225 = vector.extract_strided_slice %173 {offsets = [0, 640], sizes = [8, 32], strides = [1, 1]} : vector<8x768xf32> to vector<8x32xf32>
    %226 = vector.extract_strided_slice %208 {offsets = [0, 256], sizes = [8, 32], strides = [1, 1]} : vector<8x384xf32> to vector<8x32xf32>
    %c0_131 = arith.constant 0 : index
    %c0_132 = arith.constant 0 : index
    %227 = vector.load %arg14[%c0_131, %c0_132] : memref<1x32xf32, #tpu.memory_space<vmem>>, vector<1x32xf32>
    %228 = vector.broadcast %227 : vector<1x32xf32> to vector<8x32xf32>
    %229 = arith.addf %226, %228 : vector<8x32xf32>
    %230 = arith.mulf %216, %229 : vector<8x32xf32>
    %231 = arith.addf %225, %230 : vector<8x32xf32>
    %232 = math.tanh %231 : vector<8x32xf32>
    %cst_133 = arith.constant 1.000000e+00 : f32
    %233 = vector.broadcast %cst_133 : f32 to vector<8x32xf32>
    %234 = arith.subf %233, %224 : vector<8x32xf32>
    %235 = arith.mulf %234, %232 : vector<8x32xf32>
    %236 = arith.mulf %224, %7 : vector<8x32xf32>
    %237 = arith.addf %235, %236 : vector<8x32xf32>
    %238 = tpu.concatenate %205, %237 in 1 : vector<8x32xf32>, vector<8x32xf32> -> vector<8x64xf32>
    %239 = arith.truncf %238 : vector<8x64xf32> to vector<8x64xbf16>
    %c0_134 = arith.constant 0 : index
    %c0_135 = arith.constant 0 : index
    %240 = vector.load %arg15[%c0_134, %c0_135] : memref<64x32xbf16, #tpu.memory_space<vmem>>, vector<64x32xbf16>
    %cst_136 = arith.constant dense<0.000000e+00> : vector<8x32xf32>
    %241 = tpu.matmul %239, %240, %cst_136 {dimension_numbers = #tpu.dot_dimension_numbers<[1], [0], [0], [1], [0, 0, 1, 1], [], []>} : vector<8x64xbf16>, vector<64x32xbf16>, vector<8x32xf32> -> vector<8x32xf32>
    %c0_137 = arith.constant 0 : index
    %c0_138 = arith.constant 0 : index
    %242 = vector.load %arg16[%c0_137, %c0_138] : memref<1x32xf32, #tpu.memory_space<vmem>>, vector<1x32xf32>
    %243 = vector.broadcast %242 : vector<1x32xf32> to vector<8x32xf32>
    %244 = arith.addf %241, %243 : vector<8x32xf32>
    %c0_139 = arith.constant 0 : index
    %c0_140 = arith.constant 0 : index
    %245 = vector.load %arg17[%c0_139, %c0_140] : memref<8x32xf32, #tpu.memory_space<vmem>>, vector<8x32xf32>
    tpu.vector_store %arg17[%c0_139, %c0_140], %244 {strides = array<i32>} : memref<8x32xf32, #tpu.memory_space<vmem>>, vector<8x32xf32>,
    %c0_141 = arith.constant 0 : index
    %c0_142 = arith.constant 0 : index
    %c0_143 = arith.constant 0 : index
    %246 = vector.load %arg18[%c0_141, %c0_142, %c0_143] : memref<4x8x32xf32, #tpu.memory_space<vmem>>, vector<1x8x32xf32>
    %247 = vector.shape_cast %246 : vector<1x8x32xf32> to vector<8x32xf32>
    %248 = vector.shape_cast %134 : vector<8x32xf32> to vector<1x8x32xf32>
    tpu.vector_store %arg18[%c0_141, %c0_142, %c0_143], %248 {strides = array<i32>} : memref<4x8x32xf32, #tpu.memory_space<vmem>>, vector<1x8x32xf32>,
    %c1_144 = arith.constant 1 : index
    %c0_145 = arith.constant 0 : index
    %c0_146 = arith.constant 0 : index
    %249 = vector.load %arg18[%c1_144, %c0_145, %c0_146] : memref<4x8x32xf32, #tpu.memory_space<vmem>>, vector<1x8x32xf32>
    %250 = vector.shape_cast %249 : vector<1x8x32xf32> to vector<8x32xf32>
    %251 = vector.shape_cast %166 : vector<8x32xf32> to vector<1x8x32xf32>
    tpu.vector_store %arg18[%c1_144, %c0_145, %c0_146], %251 {strides = array<i32>} : memref<4x8x32xf32, #tpu.memory_space<vmem>>, vector<1x8x32xf32>,
    %c2_147 = arith.constant 2 : index
    %c0_148 = arith.constant 0 : index
    %c0_149 = arith.constant 0 : index
    %252 = vector.load %arg18[%c2_147, %c0_148, %c0_149] : memref<4x8x32xf32, #tpu.memory_space<vmem>>, vector<1x8x32xf32>
    %253 = vector.shape_cast %252 : vector<1x8x32xf32> to vector<8x32xf32>
    %254 = vector.shape_cast %205 : vector<8x32xf32> to vector<1x8x32xf32>
    tpu.vector_store %arg18[%c2_147, %c0_148, %c0_149], %254 {strides = array<i32>} : memref<4x8x32xf32, #tpu.memory_space<vmem>>, vector<1x8x32xf32>,
    %c3_150 = arith.constant 3 : index
    %c0_151 = arith.constant 0 : index
    %c0_152 = arith.constant 0 : index
    %255 = vector.load %arg18[%c3_150, %c0_151, %c0_152] : memref<4x8x32xf32, #tpu.memory_space<vmem>>, vector<1x8x32xf32>
    %256 = vector.shape_cast %255 : vector<1x8x32xf32> to vector<8x32xf32>
    %257 = vector.shape_cast %237 : vector<8x32xf32> to vector<1x8x32xf32>
    tpu.vector_store %arg18[%c3_150, %c0_151, %c0_152], %257 {strides = array<i32>} : memref<4x8x32xf32, #tpu.memory_space<vmem>>, vector<1x8x32xf32>,
    return
  }
}

</mosaic_0001>

<llo_original>
// kernel: decoder_forward_pallas.1
$region0: #{decoder_forward_pallas.1}
  #allocation0 [shape = 'u32[]', space=smem, size = 0x4, offset = 0x4, fixed_abs, tag = 'smem constant byte address 0x4 - core index']
  #allocation1 [shape = 'u32[144,128]{1,0:T(1,128)}', space=vmem, size = 0x12000, scoped, tag = 'internal scratch']
  #allocation2 [shape = 'f32[8,16]{1,0:T(8,128)}', space=vmem, size = 0x1000, scoped, tag = 'scratch operand']
  #allocation3 [shape = 's32[8]{0}', space=sflag, size = 0x20, scoped, tag = 'scratch operand']
  #allocation27 [shape = 's32[]', space=sflag, size = 0x4, offset = 0, fixed_abs, tag = 'sflag constant byte address 0x0 - dummy sync flag']
  #allocation28 [shape = 's32[]', space=sflag, size = 0x4, offset = 0, fixed_abs, tag = 'sflag constant byte address 0x0 - dummy sync flag']
  #allocation29 [shape = 's32[]', space=sflag, size = 0x4, offset = 0, fixed_abs, tag = 'sflag constant byte address 0x0 - dummy sync flag']
  #allocation30 [shape = 's32[]', space=sflag, size = 0x4, offset = 0, fixed_abs, tag = 'sflag constant byte address 0x0 - dummy sync flag']
  #allocation31 [shape = 's32[]', space=sflag, size = 0x4, offset = 0, fixed_abs, tag = 'sflag constant byte address 0x0 - dummy sync flag']
  #allocation32 [shape = 's32[]', space=sflag, size = 0x4, offset = 0, fixed_abs, tag = 'sflag constant byte address 0x0 - dummy sync flag']
  #allocation33 [shape = 's32[]', space=sflag, size = 0x4, offset = 0, fixed_abs, tag = 'sflag constant byte address 0x0 - dummy sync flag']
  #allocation34 [shape = 's32[]', space=sflag, size = 0x4, offset = 0, fixed_abs, tag = 'sflag constant byte address 0x0 - dummy sync flag']
  %s0 = inlined_call_operand.vmem [shape: s32[1,8], index: 0, kind: input, shape index: {}]
  %s1 = inlined_call_operand.vmem [shape: f32[32,16], index: 1, kind: input, shape index: {}]
  %s2 = inlined_call_operand.hbm [shape: f32[4,8,32], index: 2, kind: input, shape index: {}]
  %s3 = inlined_call_operand.vmem [shape: bf16[16,768], index: 3, kind: input, shape index: {}]
  %s4 = inlined_call_operand.hbm [shape: bf16[64,768], index: 4, kind: input, shape index: {}]
  %s5 = inlined_call_operand.hbm [shape: f32[1,768], index: 5, kind: input, shape index: {}]
  %s6 = inlined_call_operand.hbm [shape: f32[1,768], index: 6, kind: input, shape index: {}]
  %s7 = inlined_call_operand.vmem [shape: bf16[32,384], index: 7, kind: input, shape index: {}]
  %s8 = inlined_call_operand.hbm [shape: bf16[32,384], index: 8, kind: input, shape index: {}]
  %s9 = inlined_call_operand.hbm [shape: bf16[32,384], index: 9, kind: input, shape index: {}]
  %s10 = inlined_call_operand.vmem [shape: bf16[32,384], index: 10, kind: input, shape index: {}]
  %s11 = inlined_call_operand.hbm [shape: f32[1,32], index: 11, kind: input, shape index: {}]
  %s12 = inlined_call_operand.hbm [shape: f32[1,32], index: 12, kind: input, shape index: {}]
  %s13 = inlined_call_operand.hbm [shape: f32[1,32], index: 13, kind: input, shape index: {}]
  %s14 = inlined_call_operand.hbm [shape: f32[1,32], index: 14, kind: input, shape index: {}]
  %s15 = inlined_call_operand.vmem [shape: bf16[64,32], index: 15, kind: input, shape index: {}]
  %s16 = inlined_call_operand.hbm [shape: f32[1,32], index: 16, kind: input, shape index: {}]
  %s17 = inlined_call_operand.hbm [shape: f32[8,32], index: 17, kind: output, shape index: {0}]
  %s18 = inlined_call_operand.hbm [shape: f32[4,8,32], index: 18, kind: output, shape index: {1}]
  %19 = xla_tuple %s17, %s18
  %s20 = sld [smem:[#allocation0]]
  $region370: #{decoder_forward_pallas.1} parent=0
    _
  %s22 = ssub.s32 1, %s20
  %s23 = scalar_select 0, %s22, %s20
  $region1: #{decoder_forward_pallas.1} parent=0
    #allocation4 [shape = 'u8[512]{0}', space=smem, size = 0x200, scoped, tag = 'input window, operand 0, single buffered']
    #allocation5 [shape = 's32[1]{0}', space=sflag, size = 0x4, scoped, tag = 'scoped memory for decoder_forward_pallas.1']
    #allocation6 [shape = 's32[1]{0}', space=sflag, size = 0x4, scoped, tag = 'scoped memory for decoder_forward_pallas.1']
    #allocation7 [shape = 's32[1]{0}', space=sflag, size = 0x4, scoped, tag = 'scoped memory for decoder_forward_pallas.1']
    #allocation8 [shape = 'u8[16384]{0}', space=vmem, size = 0x4000, scoped, tag = 'input window, operand 2, single buffered']
    #allocation9 [shape = 'u8[98304]{0}', space=vmem, size = 0x18000, scoped, tag = 'input window, operand 4, single buffered']
    #allocation10 [shape = 's32[1]{0}', space=sflag, size = 0x4, scoped, tag = 'scoped memory for decoder_forward_pallas.1']
    #allocation11 [shape = 'u8[3072]{0}', space=vmem, size = 0xc00, scoped, tag = 'input window, operand 5, single buffered']
    #allocation12 [shape = 'u8[3072]{0}', space=vmem, size = 0xc00, scoped, tag = 'input window, operand 6, single buffered']
    #allocation13 [shape = 's32[1]{0}', space=sflag, size = 0x4, scoped, tag = 'scoped memory for decoder_forward_pallas.1']
    #allocation14 [shape = 'u8[24576]{0}', space=vmem, size = 0x6000, scoped, tag = 'input window, operand 8, single buffered']
    #allocation15 [shape = 'u8[24576]{0}', space=vmem, size = 0x6000, scoped, tag = 'input window, operand 9, single buffered']
    #allocation16 [shape = 's32[1]{0}', space=sflag, size = 0x4, scoped, tag = 'scoped memory for decoder_forward_pallas.1']
    #allocation17 [shape = 'u8[512]{0}', space=vmem, size = 0x400, scoped, tag = 'input window, operand 11, single buffered']
    #allocation18 [shape = 'u8[512]{0}', space=vmem, size = 0x400, scoped, tag = 'input window, operand 12, single buffered']
    #allocation19 [shape = 's32[1]{0}', space=sflag, size = 0x4, scoped, tag = 'scoped memory for decoder_forward_pallas.1']
    #allocation20 [shape = 'u8[512]{0}', space=vmem, size = 0x400, scoped, tag = 'input window, operand 13, single buffered']
    #allocation21 [shape = 'u8[512]{0}', space=vmem, size = 0x400, scoped, tag = 'input window, operand 14, single buffered']
    #allocation22 [shape = 's32[1]{0}', space=sflag, size = 0x4, scoped, tag = 'scoped memory for decoder_forward_pallas.1']
    #allocation23 [shape = 'u8[512]{0}', space=vmem, size = 0x400, scoped, tag = 'input window, operand 16, single buffered']
    #allocation24 [shape = 'u8[4096]{0}', space=vmem, size = 0x1000, scoped, tag = 'output window, operand 0, single buffered']
    #allocation25 [shape = 'u8[16384]{0}', space=vmem, size = 0x4000, scoped, tag = 'output window, operand 1, single buffered']
    #allocation26 [shape = 's32[1]{0}', space=sflag, size = 0x4, scoped, tag = 'scoped memory for decoder_forward_pallas.1']
    %24 = vsyncpa [#allocation7], 0
    %25 = vsyncpa [#allocation5], 0
    %26 = vsyncpa [#allocation10], 0
    %27 = vsyncpa [#allocation13], 0
    %28 = vsyncpa [#allocation16], 0
    %29 = vsyncpa [#allocation19], 0
    %30 = vsyncpa [#allocation22], 0
    %31 = vsyncpa [#allocation6], 0
    %32 = vsyncpa [#allocation26], 0
    // Predicated region
    $region2: #{decoder_forward_pallas.1} parent=1 // pred_check
      _
    $region3: #{decoder_forward_pallas.1} parent=1 // pred_check_branch
      %34 = sbr.rel (0) target = $region5
    $region4: #{decoder_forward_pallas.1} parent=1 // pred_region
      %s36 = ssub.s32 16, 16
      %37 = vsyncadd [#allocation7], %s36
      %s39 = sshll.u32 %s0, 4
      %s40 = int_to_ptr.vmem [resolvable:$true] %s39
      %42 = dma.vmem_to_smem %s40, 16, [#allocation4], [#allocation7]
    $region5: #{decoder_forward_pallas.1} parent=1 // pred_fallthru
      _
    // Predicated region
    $region6: #{decoder_forward_pallas.1} parent=1 // pred_check
      _
    $region7: #{decoder_forward_pallas.1} parent=1 // pred_check_branch
      %44 = sbr.rel (0) target = $region9
    $region8: #{decoder_forward_pallas.1} parent=1 // pred_region
      %s46 = ssub.s32 512, 512
      %47 = vsyncadd [#allocation5], %s46
      %s48 = sshll.u32 [#allocation8], 4
      %s49 = int_to_ptr.vmem [resolvable:$true] %s48
      %54 = dma.hbm_to_vmem [thread:$0]  %s2, 512, %s49, [#allocation5], 128, 128, 8
    $region9: #{decoder_forward_pallas.1} parent=1 // pred_fallthru
      _
    // Predicated region
    $region10: #{decoder_forward_pallas.1} parent=1 // pred_check
      _
    $region11: #{decoder_forward_pallas.1} parent=1 // pred_check_branch
      %56 = sbr.rel (0) target = $region13
    $region12: #{decoder_forward_pallas.1} parent=1 // pred_region
      _
    $region13: #{decoder_forward_pallas.1} parent=1 // pred_fallthru
      _
    // Predicated region
    $region14: #{decoder_forward_pallas.1} parent=1 // pred_check
      _
    $region15: #{decoder_forward_pallas.1} parent=1 // pred_check_branch
      %58 = sbr.rel (0) target = $region17
    $region16: #{decoder_forward_pallas.1} parent=1 // pred_region
      %s60 = ssub.s32 3072, 3072
      %61 = vsyncadd [#allocation10], %s60
      %s62 = sshll.u32 [#allocation9], 4
      %s63 = int_to_ptr.vmem [resolvable:$true] %s62
      %68 = dma.hbm_to_vmem [thread:$0]  %s4, 3072, %s63, [#allocation10], 384, 384, 24
    $region17: #{decoder_forward_pallas.1} parent=1 // pred_fallthru
      _
    // Predicated region
    $region18: #{decoder_forward_pallas.1} parent=1 // pred_check
      _
    $region19: #{decoder_forward_pallas.1} parent=1 // pred_check_branch
      %70 = sbr.rel (0) target = $region21
    $region20: #{decoder_forward_pallas.1} parent=1 // pred_region
      %s72 = ssub.s32 96, 96
      %73 = vsyncadd [#allocation10], %s72
      %s75 = sshll.u32 [#allocation11], 4
      %s76 = int_to_ptr.vmem [resolvable:$true] %s75
      %78 = dma.hbm_to_vmem [thread:$0]  %s5, 96, %s76, [#allocation10]
    $region21: #{decoder_forward_pallas.1} parent=1 // pred_fallthru
      _
    // Predicated region
    $region22: #{decoder_forward_pallas.1} parent=1 // pred_check
      _
    $region23: #{decoder_forward_pallas.1} parent=1 // pred_check_branch
      %80 = sbr.rel (0) target = $region25
    $region24: #{decoder_forward_pallas.1} parent=1 // pred_region
      %s82 = ssub.s32 96, 96
      %83 = vsyncadd [#allocation13], %s82
      %s85 = sshll.u32 [#allocation12], 4
      %s86 = int_to_ptr.vmem [resolvable:$true] %s85
      %88 = dma.hbm_to_vmem [thread:$0]  %s6, 96, %s86, [#allocation13]
    $region25: #{decoder_forward_pallas.1} parent=1 // pred_fallthru
      _
    // Predicated region
    $region26: #{decoder_forward_pallas.1} parent=1 // pred_check
      _
    $region27: #{decoder_forward_pallas.1} parent=1 // pred_check_branch
      %90 = sbr.rel (0) target = $region29
    $region28: #{decoder_forward_pallas.1} parent=1 // pred_region
      _
    $region29: #{decoder_forward_pallas.1} parent=1 // pred_fallthru
      _
    // Predicated region
    $region30: #{decoder_forward_pallas.1} parent=1 // pred_check
      _
    $region31: #{decoder_forward_pallas.1} parent=1 // pred_check_branch
      %92 = sbr.rel (0) target = $region33
    $region32: #{decoder_forward_pallas.1} parent=1 // pred_region
      %s94 = ssub.s32 768, 768
      %95 = vsyncadd [#allocation13], %s94
      %s96 = sshll.u32 [#allocation14], 4
      %s97 = int_to_ptr.vmem [resolvable:$true] %s96
      %102 = dma.hbm_to_vmem [thread:$0]  %s8, 768, %s97, [#allocation13], 192, 192, 12
    $region33: #{decoder_forward_pallas.1} parent=1 // pred_fallthru
      _
    // Predicated region
    $region34: #{decoder_forward_pallas.1} parent=1 // pred_check
      _
    $region35: #{decoder_forward_pallas.1} parent=1 // pred_check_branch
      %104 = sbr.rel (0) target = $region37
    $region36: #{decoder_forward_pallas.1} parent=1 // pred_region
      %s106 = ssub.s32 768, 768
      %107 = vsyncadd [#allocation16], %s106
      %s108 = sshll.u32 [#allocation15], 4
      %s109 = int_to_ptr.vmem [resolvable:$true] %s108
      %114 = dma.hbm_to_vmem [thread:$0]  %s9, 768, %s109, [#allocation16], 192, 192, 12
    $region37: #{decoder_forward_pallas.1} parent=1 // pred_fallthru
      _
    // Predicated region
    $region38: #{decoder_forward_pallas.1} parent=1 // pred_check
      _
    $region39: #{decoder_forward_pallas.1} parent=1 // pred_check_branch
      %116 = sbr.rel (0) target = $region41
    $region40: #{decoder_forward_pallas.1} parent=1 // pred_region
      _
    $region41: #{decoder_forward_pallas.1} parent=1 // pred_fallthru
      _
    // Predicated region
    $region42: #{decoder_forward_pallas.1} parent=1 // pred_check
      _
    $region43: #{decoder_forward_pallas.1} parent=1 // pred_check_branch
      %118 = sbr.rel (0) target = $region45
    $region44: #{decoder_forward_pallas.1} parent=1 // pred_region
      %s120 = ssub.s32 16, 16
      %121 = vsyncadd [#allocation16], %s120
      %s123 = sshll.u32 [#allocation17], 4
      %s124 = int_to_ptr.vmem [resolvable:$true] %s123
      %126 = dma.hbm_to_vmem [thread:$0]  %s11, 16, %s124, [#allocation16]
    $region45: #{decoder_forward_pallas.1} parent=1 // pred_fallthru
      _
    // Predicated region
    $region46: #{decoder_forward_pallas.1} parent=1 // pred_check
      _
    $region47: #{decoder_forward_pallas.1} parent=1 // pred_check_branch
      %128 = sbr.rel (0) target = $region49
    $region48: #{decoder_forward_pallas.1} parent=1 // pred_region
      %s130 = ssub.s32 16, 16
      %131 = vsyncadd [#allocation19], %s130
      %s133 = sshll.u32 [#allocation18], 4
      %s134 = int_to_ptr.vmem [resolvable:$true] %s133
      %136 = dma.hbm_to_vmem [thread:$0]  %s12, 16, %s134, [#allocation19]
    $region49: #{decoder_forward_pallas.1} parent=1 // pred_fallthru
      _
    // Predicated region
    $region50: #{decoder_forward_pallas.1} parent=1 // pred_check
      _
    $region51: #{decoder_forward_pallas.1} parent=1 // pred_check_branch
      %138 = sbr.rel (0) target = $region53
    $region52: #{decoder_forward_pallas.1} parent=1 // pred_region
      %s140 = ssub.s32 16, 16
      %141 = vsyncadd [#allocation19], %s140
      %s143 = sshll.u32 [#allocation20], 4
      %s144 = int_to_ptr.vmem [resolvable:$true] %s143
      %146 = dma.hbm_to_vmem [thread:$0]  %s13, 16, %s144, [#allocation19]
    $region53: #{decoder_forward_pallas.1} parent=1 // pred_fallthru
      _
    // Predicated region
    $region54: #{decoder_forward_pallas.1} parent=1 // pred_check
      _
    $region55: #{decoder_forward_pallas.1} parent=1 // pred_check_branch
      %148 = sbr.rel (0) target = $region57
    $region56: #{decoder_forward_pallas.1} parent=1 // pred_region
      %s150 = ssub.s32 16, 16
      %151 = vsyncadd [#allocation22], %s150
      %s153 = sshll.u32 [#allocation21], 4
      %s154 = int_to_ptr.vmem [resolvable:$true] %s153
      %156 = dma.hbm_to_vmem [thread:$0]  %s14, 16, %s154, [#allocation22]
    $region57: #{decoder_forward_pallas.1} parent=1 // pred_fallthru
      _
    // Predicated region
    $region58: #{decoder_forward_pallas.1} parent=1 // pred_check
      _
    $region59: #{decoder_forward_pallas.1} parent=1 // pred_check_branch
      %158 = sbr.rel (0) target = $region61
    $region60: #{decoder_forward_pallas.1} parent=1 // pred_region
      _
    $region61: #{decoder_forward_pallas.1} parent=1 // pred_fallthru
      _
    // Predicated region
    $region62: #{decoder_forward_pallas.1} parent=1 // pred_check
      _
    $region63: #{decoder_forward_pallas.1} parent=1 // pred_check_branch
      %160 = sbr.rel (0) target = $region65
    $region64: #{decoder_forward_pallas.1} parent=1 // pred_region
      %s162 = ssub.s32 16, 16
      %163 = vsyncadd [#allocation22], %s162
      %s165 = sshll.u32 [#allocation23], 4
      %s166 = int_to_ptr.vmem [resolvable:$true] %s165
      %168 = dma.hbm_to_vmem [thread:$0]  %s16, 16, %s166, [#allocation22]
    $region65: #{decoder_forward_pallas.1} parent=1 // pred_fallthru
      _
    // Predicated region
    $region66: #{decoder_forward_pallas.1} parent=1 // pred_check
      _
    $region67: #{decoder_forward_pallas.1} parent=1 // pred_check_branch
      %170 = sbr.rel (0) target = $region69
    $region68: #{decoder_forward_pallas.1} parent=1 // pred_region
      %171 = dma.done [#allocation7], 16
    $region69: #{decoder_forward_pallas.1} parent=1 // pred_fallthru
      _
    // Predicated region
    $region70: #{decoder_forward_pallas.1} parent=1 // pred_check
      _
    $region71: #{decoder_forward_pallas.1} parent=1 // pred_check_branch
      %173 = sbr.rel (0) target = $region73
    $region72: #{decoder_forward_pallas.1} parent=1 // pred_region
      %174 = dma.done [#allocation5], 512
    $region73: #{decoder_forward_pallas.1} parent=1 // pred_fallthru
      _
    // Predicated region
    $region74: #{decoder_forward_pallas.1} parent=1 // pred_check
      _
    $region75: #{decoder_forward_pallas.1} parent=1 // pred_check_branch
      %176 = sbr.rel (0) target = $region77
    $region76: #{decoder_forward_pallas.1} parent=1 // pred_region
      %177 = dma.done [#allocation10], 3072
    $region77: #{decoder_forward_pallas.1} parent=1 // pred_fallthru
      _
    // Predicated region
    $region78: #{decoder_forward_pallas.1} parent=1 // pred_check
      _
    $region79: #{decoder_forward_pallas.1} parent=1 // pred_check_branch
      %179 = sbr.rel (0) target = $region81
    $region80: #{decoder_forward_pallas.1} parent=1 // pred_region
      %180 = dma.done [#allocation10], 96
    $region81: #{decoder_forward_pallas.1} parent=1 // pred_fallthru
      _
    // Predicated region
    $region82: #{decoder_forward_pallas.1} parent=1 // pred_check
      _
    $region83: #{decoder_forward_pallas.1} parent=1 // pred_check_branch
      %182 = sbr.rel (0) target = $region85
    $region84: #{decoder_forward_pallas.1} parent=1 // pred_region
      %183 = dma.done [#allocation13], 96
    $region85: #{decoder_forward_pallas.1} parent=1 // pred_fallthru
      _
    // Predicated region
    $region86: #{decoder_forward_pallas.1} parent=1 // pred_check
      _
    $region87: #{decoder_forward_pallas.1} parent=1 // pred_check_branch
      %185 = sbr.rel (0) target = $region89
    $region88: #{decoder_forward_pallas.1} parent=1 // pred_region
      %186 = dma.done [#allocation13], 768
    $region89: #{decoder_forward_pallas.1} parent=1 // pred_fallthru
      _
    // Predicated region
    $region90: #{decoder_forward_pallas.1} parent=1 // pred_check
      _
    $region91: #{decoder_forward_pallas.1} parent=1 // pred_check_branch
      %188 = sbr.rel (0) target = $region93
    $region92: #{decoder_forward_pallas.1} parent=1 // pred_region
      %189 = dma.done [#allocation16], 768
    $region93: #{decoder_forward_pallas.1} parent=1 // pred_fallthru
      _
    // Predicated region
    $region94: #{decoder_forward_pallas.1} parent=1 // pred_check
      _
    $region95: #{decoder_forward_pallas.1} parent=1 // pred_check_branch
      %191 = sbr.rel (0) target = $region97
    $region96: #{decoder_forward_pallas.1} parent=1 // pred_region
      %192 = dma.done [#allocation16], 16
    $region97: #{decoder_forward_pallas.1} parent=1 // pred_fallthru
      _
    // Predicated region
    $region98: #{decoder_forward_pallas.1} parent=1 // pred_check
      _
    $region99: #{decoder_forward_pallas.1} parent=1 // pred_check_branch
      %194 = sbr.rel (0) target = $region101
    $region100: #{decoder_forward_pallas.1} parent=1 // pred_region
      %195 = dma.done [#allocation19], 16
    $region101: #{decoder_forward_pallas.1} parent=1 // pred_fallthru
      _
    // Predicated region
    $region102: #{decoder_forward_pallas.1} parent=1 // pred_check
      _
    $region103: #{decoder_forward_pallas.1} parent=1 // pred_check_branch
      %197 = sbr.rel (0) target = $region105
    $region104: #{decoder_forward_pallas.1} parent=1 // pred_region
      %198 = dma.done [#allocation19], 16
    $region105: #{decoder_forward_pallas.1} parent=1 // pred_fallthru
      _
    // Predicated region
    $region106: #{decoder_forward_pallas.1} parent=1 // pred_check
      _
    $region107: #{decoder_forward_pallas.1} parent=1 // pred_check_branch
      %200 = sbr.rel (0) target = $region109
    $region108: #{decoder_forward_pallas.1} parent=1 // pred_region
      %201 = dma.done [#allocation22], 16
    $region109: #{decoder_forward_pallas.1} parent=1 // pred_fallthru
      _
    // Predicated region
    $region110: #{decoder_forward_pallas.1} parent=1 // pred_check
      _
    $region111: #{decoder_forward_pallas.1} parent=1 // pred_check_branch
      %203 = sbr.rel (0) target = $region113
    $region112: #{decoder_forward_pallas.1} parent=1 // pred_region
      %204 = dma.done [#allocation22], 16
    $region113: #{decoder_forward_pallas.1} parent=1 // pred_fallthru
      _
    %205 = sfence
    %v207 = vld [vmem:[#allocation8] sm:$0xff]
    %s208 = scalar_lea.vmem [#allocation8], 8
    %v209 = vld [vmem:[%s208] sm:$0xff]
    %s210 = scalar_lea.vmem [#allocation8], 16
    %v211 = vld [vmem:[%s210] sm:$0xff]
    %s212 = scalar_lea.vmem [#allocation8], 24
    %v213 = vld [vmem:[%s212] sm:$0xff]
    %s214 = sld [smem:[#allocation4]]
    %p215 = scmp.gt.s32.totalorder %s214, 0
    %s216 = scalar_select %p215, %s214, 0
    %p217 = scmp.lt.s32.totalorder %s216, 31
    %s218 = scalar_select %p217, %s216, 31
    %s219 = scalar_lea.vmem %s1, %s218
    %p221 = scmp.lt.u32.totalorder 1, 8
    %p222 = pneg %p221
    // Predicated region
    $region114: #{decoder_forward_pallas.1} parent=1 // pred_check
      _
    $region115: #{decoder_forward_pallas.1} parent=1 // pred_check_branch
      %224 = sbr.rel (%p221) target = $region117
    $region116: #{decoder_forward_pallas.1} parent=1 // pred_region
      %s239 = sand.u32 1, 7
      %p240 = scmp.eq.s32.totalorder %s239, 0
      %p241 = pneg %p240
      // Predicated region
      $region129: #{decoder_forward_pallas.1} parent=116 // pred_check
        _
      $region130: #{decoder_forward_pallas.1} parent=116 // pred_check_branch
        %243 = sbr.rel (%p240) target = $region132
      $region131: #{decoder_forward_pallas.1} parent=116 // pred_region
        %s244 = sand.u32 1, 7
        %s245 = ssub.s32 1, %s244
        %s246 = scalar_lea.vmem %s219, %s245
        %s247 = ssub.s32 1, %s244
        %s248 = scalar_lea.vmem [#allocation2], %s247
        %s249 = sshllo.u32 0, %s244
        loop: start=0, step=1, limit=1
        $region133: #{decoder_forward_pallas.1} parent=131 // loop_pre_header
          _
        $region134: #{decoder_forward_pallas.1} parent=131 // loop_header
          %s251 = sphi 0, %s255
          %p252 = scmp.ge.s32.totalorder %s251, 1
          %s256 = sphi %s246, %s246
          %s257 = sphi %s248, %s248
        $region135: #{decoder_forward_pallas.1} parent=131 // loop_header_branch
          %254 = sbr.rel (%p252) target = $region139
        $region136: #{decoder_forward_pallas.1} parent=131 // loop_body
          %v258 = vld [vmem:[%s256] sm:%s249]
          %259 = vst [vmem:[%s257] sm:%s249] %v258
        $region137: #{decoder_forward_pallas.1} parent=131 // loop_footer
          %s255 = sadd.s32 1, %s251
        $region138: #{decoder_forward_pallas.1} parent=131 // loop_footer_branch
          %250 = sbr.rel target = $region134
        $region139: #{decoder_forward_pallas.1} parent=131 // loop_exit
          _
      $region132: #{decoder_forward_pallas.1} parent=116 // pred_fallthru
        _
    $region117: #{decoder_forward_pallas.1} parent=1 // pred_fallthru
      _
    // Predicated region
    $region118: #{decoder_forward_pallas.1} parent=1 // pred_check
      %p225 = pneg %p221
    $region119: #{decoder_forward_pallas.1} parent=1 // pred_check_branch
      %227 = sbr.rel (%p225) target = $region121
    $region120: #{decoder_forward_pallas.1} parent=1 // pred_region
      %s228 = sshllo.u32 0, 1
      loop: start=0, step=1, limit=1
      $region122: #{decoder_forward_pallas.1} parent=120 // loop_pre_header
        _
      $region123: #{decoder_forward_pallas.1} parent=120 // loop_header
        %s230 = sphi 0, %s234
        %p231 = scmp.ge.s32.totalorder %s230, 1
        %s235 = sphi %s219, %s219
        %s236 = sphi [#allocation2], [#allocation2]
      $region124: #{decoder_forward_pallas.1} parent=120 // loop_header_branch
        %233 = sbr.rel (%p231) target = $region128
      $region125: #{decoder_forward_pallas.1} parent=120 // loop_body
        %v237 = vld [vmem:[%s235] sm:%s228]
        %238 = vst [vmem:[%s236] sm:%s228] %v237
      $region126: #{decoder_forward_pallas.1} parent=120 // loop_footer
        %s234 = sadd.s32 1, %s230
      $region127: #{decoder_forward_pallas.1} parent=120 // loop_footer_branch
        %229 = sbr.rel target = $region123
      $region128: #{decoder_forward_pallas.1} parent=120 // loop_exit
        _
    $region121: #{decoder_forward_pallas.1} parent=1 // pred_fallthru
      _
    // Predicated region
    $region140: #{decoder_forward_pallas.1} parent=1 // pred_check
      _
    $region141: #{decoder_forward_pallas.1} parent=1 // pred_check_branch
      %262 = sbr.rel (0) target = $region143
    $region142: #{decoder_forward_pallas.1} parent=1 // pred_region
      %263 = vsyncadd [#allocation3], 16
    $region143: #{decoder_forward_pallas.1} parent=1 // pred_fallthru
      _
    %s264 = sld [smem:[#allocation4 + $0x1]]
    %p265 = scmp.gt.s32.totalorder %s264, 0
    %s266 = scalar_select %p265, %s264, 0
    %p267 = scmp.lt.s32.totalorder %s266, 31
    %s268 = scalar_select %p267, %s266, 31
    %s269 = scalar_lea.vmem %s1, %s268
    %s270 = scalar_lea.vmem [#allocation2], 1
    %s271 = scalar_lea.sflag [#allocation3], 1
    %p273 = scmp.lt.u32.totalorder 1, 8
    %p274 = pneg %p273
    // Predicated region
    $region144: #{decoder_forward_pallas.1} parent=1 // pred_check
      _
    $region145: #{decoder_forward_pallas.1} parent=1 // pred_check_branch
      %276 = sbr.rel (%p273) target = $region147
    $region146: #{decoder_forward_pallas.1} parent=1 // pred_region
      %s291 = sand.u32 1, 7
      %p292 = scmp.eq.s32.totalorder %s291, 0
      %p293 = pneg %p292
      // Predicated region
      $region159: #{decoder_forward_pallas.1} parent=146 // pred_check
        _
      $region160: #{decoder_forward_pallas.1} parent=146 // pred_check_branch
        %295 = sbr.rel (%p292) target = $region162
      $region161: #{decoder_forward_pallas.1} parent=146 // pred_region
        %s296 = sand.u32 1, 7
        %s297 = ssub.s32 1, %s296
        %s298 = scalar_lea.vmem %s269, %s297
        %s299 = ssub.s32 1, %s296
        %s300 = scalar_lea.vmem %s270, %s299 [#allocation2]
        %s301 = sshllo.u32 0, %s296
        loop: start=0, step=1, limit=1
        $region163: #{decoder_forward_pallas.1} parent=161 // loop_pre_header
          _
        $region164: #{decoder_forward_pallas.1} parent=161 // loop_header
          %s303 = sphi 0, %s307
          %p304 = scmp.ge.s32.totalorder %s303, 1
          %s308 = sphi %s298, %s298
          %s309 = sphi %s300, %s300
        $region165: #{decoder_forward_pallas.1} parent=161 // loop_header_branch
          %306 = sbr.rel (%p304) target = $region169
        $region166: #{decoder_forward_pallas.1} parent=161 // loop_body
          %v310 = vld [vmem:[%s308] sm:%s301]
          %311 = vst [vmem:[%s309] sm:%s301] %v310
        $region167: #{decoder_forward_pallas.1} parent=161 // loop_footer
          %s307 = sadd.s32 1, %s303
        $region168: #{decoder_forward_pallas.1} parent=161 // loop_footer_branch
          %302 = sbr.rel target = $region164
        $region169: #{decoder_forward_pallas.1} parent=161 // loop_exit
          _
      $region162: #{decoder_forward_pallas.1} parent=146 // pred_fallthru
        _
    $region147: #{decoder_forward_pallas.1} parent=1 // pred_fallthru
      _
    // Predicated region
    $region148: #{decoder_forward_pallas.1} parent=1 // pred_check
      %p277 = pneg %p273
    $region149: #{decoder_forward_pallas.1} parent=1 // pred_check_branch
      %279 = sbr.rel (%p277) target = $region151
    $region150: #{decoder_forward_pallas.1} parent=1 // pred_region
      %s280 = sshllo.u32 0, 1
      loop: start=0, step=1, limit=1
      $region152: #{decoder_forward_pallas.1} parent=150 // loop_pre_header
        _
      $region153: #{decoder_forward_pallas.1} parent=150 // loop_header
        %s282 = sphi 0, %s286
        %p283 = scmp.ge.s32.totalorder %s282, 1
        %s287 = sphi %s269, %s269
        %s288 = sphi %s270, %s270
      $region154: #{decoder_forward_pallas.1} parent=150 // loop_header_branch
        %285 = sbr.rel (%p283) target = $region158
      $region155: #{decoder_forward_pallas.1} parent=150 // loop_body
        %v289 = vld [vmem:[%s287] sm:%s280]
        %290 = vst [vmem:[%s288] sm:%s280] %v289
      $region156: #{decoder_forward_pallas.1} parent=150 // loop_footer
        %s286 = sadd.s32 1, %s282
      $region157: #{decoder_forward_pallas.1} parent=150 // loop_footer_branch
        %281 = sbr.rel target = $region153
      $region158: #{decoder_forward_pallas.1} parent=150 // loop_exit
        _
    $region151: #{decoder_forward_pallas.1} parent=1 // pred_fallthru
      _
    // Predicated region
    $region170: #{decoder_forward_pallas.1} parent=1 // pred_check
      _
    $region171: #{decoder_forward_pallas.1} parent=1 // pred_check_branch
      %314 = sbr.rel (0) target = $region173
    $region172: #{decoder_forward_pallas.1} parent=1 // pred_region
      %315 = vsyncadd %s271, 16
    $region173: #{decoder_forward_pallas.1} parent=1 // pred_fallthru
      _
    %s316 = sld [smem:[#allocation4 + $0x2]]
    %p317 = scmp.gt.s32.totalorder %s316, 0
    %s318 = scalar_select %p317, %s316, 0
    %p319 = scmp.lt.s32.totalorder %s318, 31
    %s320 = scalar_select %p319, %s318, 31
    %s321 = scalar_lea.vmem %s1, %s320
    %s322 = scalar_lea.vmem [#allocation2], 2
    %s323 = scalar_lea.sflag [#allocation3], 2
    %p325 = scmp.lt.u32.totalorder 1, 8
    %p326 = pneg %p325
    // Predicated region
    $region174: #{decoder_forward_pallas.1} parent=1 // pred_check
      _
    $region175: #{decoder_forward_pallas.1} parent=1 // pred_check_branch
      %328 = sbr.rel (%p325) target = $region177
    $region176: #{decoder_forward_pallas.1} parent=1 // pred_region
      %s343 = sand.u32 1, 7
      %p344 = scmp.eq.s32.totalorder %s343, 0
      %p345 = pneg %p344
      // Predicated region
      $region189: #{decoder_forward_pallas.1} parent=176 // pred_check
        _
      $region190: #{decoder_forward_pallas.1} parent=176 // pred_check_branch
        %347 = sbr.rel (%p344) target = $region192
      $region191: #{decoder_forward_pallas.1} parent=176 // pred_region
        %s348 = sand.u32 1, 7
        %s349 = ssub.s32 1, %s348
        %s350 = scalar_lea.vmem %s321, %s349
        %s351 = ssub.s32 1, %s348
        %s352 = scalar_lea.vmem %s322, %s351 [#allocation2]
        %s353 = sshllo.u32 0, %s348
        loop: start=0, step=1, limit=1
        $region193: #{decoder_forward_pallas.1} parent=191 // loop_pre_header
          _
        $region194: #{decoder_forward_pallas.1} parent=191 // loop_header
          %s355 = sphi 0, %s359
          %p356 = scmp.ge.s32.totalorder %s355, 1
          %s360 = sphi %s350, %s350
          %s361 = sphi %s352, %s352
        $region195: #{decoder_forward_pallas.1} parent=191 // loop_header_branch
          %358 = sbr.rel (%p356) target = $region199
        $region196: #{decoder_forward_pallas.1} parent=191 // loop_body
          %v362 = vld [vmem:[%s360] sm:%s353]
          %363 = vst [vmem:[%s361] sm:%s353] %v362
        $region197: #{decoder_forward_pallas.1} parent=191 // loop_footer
          %s359 = sadd.s32 1, %s355
        $region198: #{decoder_forward_pallas.1} parent=191 // loop_footer_branch
          %354 = sbr.rel target = $region194
        $region199: #{decoder_forward_pallas.1} parent=191 // loop_exit
          _
      $region192: #{decoder_forward_pallas.1} parent=176 // pred_fallthru
        _
    $region177: #{decoder_forward_pallas.1} parent=1 // pred_fallthru
      _
    // Predicated region
    $region178: #{decoder_forward_pallas.1} parent=1 // pred_check
      %p329 = pneg %p325
    $region179: #{decoder_forward_pallas.1} parent=1 // pred_check_branch
      %331 = sbr.rel (%p329) target = $region181
    $region180: #{decoder_forward_pallas.1} parent=1 // pred_region
      %s332 = sshllo.u32 0, 1
      loop: start=0, step=1, limit=1
      $region182: #{decoder_forward_pallas.1} parent=180 // loop_pre_header
        _
      $region183: #{decoder_forward_pallas.1} parent=180 // loop_header
        %s334 = sphi 0, %s338
        %p335 = scmp.ge.s32.totalorder %s334, 1
        %s339 = sphi %s321, %s321
        %s340 = sphi %s322, %s322
      $region184: #{decoder_forward_pallas.1} parent=180 // loop_header_branch
        %337 = sbr.rel (%p335) target = $region188
      $region185: #{decoder_forward_pallas.1} parent=180 // loop_body
        %v341 = vld [vmem:[%s339] sm:%s332]
        %342 = vst [vmem:[%s340] sm:%s332] %v341
      $region186: #{decoder_forward_pallas.1} parent=180 // loop_footer
        %s338 = sadd.s32 1, %s334
      $region187: #{decoder_forward_pallas.1} parent=180 // loop_footer_branch
        %333 = sbr.rel target = $region183
      $region188: #{decoder_forward_pallas.1} parent=180 // loop_exit
        _
    $region181: #{decoder_forward_pallas.1} parent=1 // pred_fallthru
      _
    // Predicated region
    $region200: #{decoder_forward_pallas.1} parent=1 // pred_check
      _
    $region201: #{decoder_forward_pallas.1} parent=1 // pred_check_branch
      %366 = sbr.rel (0) target = $region203
    $region202: #{decoder_forward_pallas.1} parent=1 // pred_region
      %367 = vsyncadd %s323, 16
    $region203: #{decoder_forward_pallas.1} parent=1 // pred_fallthru
      _
    %s368 = sld [smem:[#allocation4 + $0x3]]
    %p369 = scmp.gt.s32.totalorder %s368, 0
    %s370 = scalar_select %p369, %s368, 0
    %p371 = scmp.lt.s32.totalorder %s370, 31
    %s372 = scalar_select %p371, %s370, 31
    %s373 = scalar_lea.vmem %s1, %s372
    %s374 = scalar_lea.vmem [#allocation2], 3
    %s375 = scalar_lea.sflag [#allocation3], 3
    %p377 = scmp.lt.u32.totalorder 1, 8
    %p378 = pneg %p377
    // Predicated region
    $region204: #{decoder_forward_pallas.1} parent=1 // pred_check
      _
    $region205: #{decoder_forward_pallas.1} parent=1 // pred_check_branch
      %380 = sbr.rel (%p377) target = $region207
    $region206: #{decoder_forward_pallas.1} parent=1 // pred_region
      %s395 = sand.u32 1, 7
      %p396 = scmp.eq.s32.totalorder %s395, 0
      %p397 = pneg %p396
      // Predicated region
      $region219: #{decoder_forward_pallas.1} parent=206 // pred_check
        _
      $region220: #{decoder_forward_pallas.1} parent=206 // pred_check_branch
        %399 = sbr.rel (%p396) target = $region222
      $region221: #{decoder_forward_pallas.1} parent=206 // pred_region
        %s400 = sand.u32 1, 7
        %s401 = ssub.s32 1, %s400
        %s402 = scalar_lea.vmem %s373, %s401
        %s403 = ssub.s32 1, %s400
        %s404 = scalar_lea.vmem %s374, %s403 [#allocation2]
        %s405 = sshllo.u32 0, %s400
        loop: start=0, step=1, limit=1
        $region223: #{decoder_forward_pallas.1} parent=221 // loop_pre_header
          _
        $region224: #{decoder_forward_pallas.1} parent=221 // loop_header
          %s407 = sphi 0, %s411
          %p408 = scmp.ge.s32.totalorder %s407, 1
          %s412 = sphi %s402, %s402
          %s413 = sphi %s404, %s404
        $region225: #{decoder_forward_pallas.1} parent=221 // loop_header_branch
          %410 = sbr.rel (%p408) target = $region229
        $region226: #{decoder_forward_pallas.1} parent=221 // loop_body
          %v414 = vld [vmem:[%s412] sm:%s405]
          %415 = vst [vmem:[%s413] sm:%s405] %v414
        $region227: #{decoder_forward_pallas.1} parent=221 // loop_footer
          %s411 = sadd.s32 1, %s407
        $region228: #{decoder_forward_pallas.1} parent=221 // loop_footer_branch
          %406 = sbr.rel target = $region224
        $region229: #{decoder_forward_pallas.1} parent=221 // loop_exit
          _
      $region222: #{decoder_forward_pallas.1} parent=206 // pred_fallthru
        _
    $region207: #{decoder_forward_pallas.1} parent=1 // pred_fallthru
      _
    // Predicated region
    $region208: #{decoder_forward_pallas.1} parent=1 // pred_check
      %p381 = pneg %p377
    $region209: #{decoder_forward_pallas.1} parent=1 // pred_check_branch
      %383 = sbr.rel (%p381) target = $region211
    $region210: #{decoder_forward_pallas.1} parent=1 // pred_region
      %s384 = sshllo.u32 0, 1
      loop: start=0, step=1, limit=1
      $region212: #{decoder_forward_pallas.1} parent=210 // loop_pre_header
        _
      $region213: #{decoder_forward_pallas.1} parent=210 // loop_header
        %s386 = sphi 0, %s390
        %p387 = scmp.ge.s32.totalorder %s386, 1
        %s391 = sphi %s373, %s373
        %s392 = sphi %s374, %s374
      $region214: #{decoder_forward_pallas.1} parent=210 // loop_header_branch
        %389 = sbr.rel (%p387) target = $region218
      $region215: #{decoder_forward_pallas.1} parent=210 // loop_body
        %v393 = vld [vmem:[%s391] sm:%s384]
        %394 = vst [vmem:[%s392] sm:%s384] %v393
      $region216: #{decoder_forward_pallas.1} parent=210 // loop_footer
        %s390 = sadd.s32 1, %s386
      $region217: #{decoder_forward_pallas.1} parent=210 // loop_footer_branch
        %385 = sbr.rel target = $region213
      $region218: #{decoder_forward_pallas.1} parent=210 // loop_exit
        _
    $region211: #{decoder_forward_pallas.1} parent=1 // pred_fallthru
      _
    // Predicated region
    $region230: #{decoder_forward_pallas.1} parent=1 // pred_check
      _
    $region231: #{decoder_forward_pallas.1} parent=1 // pred_check_branch
      %418 = sbr.rel (0) target = $region233
    $region232: #{decoder_forward_pallas.1} parent=1 // pred_region
      %419 = vsyncadd %s375, 16
    $region233: #{decoder_forward_pallas.1} parent=1 // pred_fallthru
      _
    %s420 = sld [smem:[#allocation4 + $0x4]]
    %p421 = scmp.gt.s32.totalorder %s420, 0
    %s422 = scalar_select %p421, %s420, 0
    %p423 = scmp.lt.s32.totalorder %s422, 31
    %s424 = scalar_select %p423, %s422, 31
    %s425 = scalar_lea.vmem %s1, %s424
    %s426 = scalar_lea.vmem [#allocation2], 4
    %s427 = scalar_lea.sflag [#allocation3], 4
    %p429 = scmp.lt.u32.totalorder 1, 8
    %p430 = pneg %p429
    // Predicated region
    $region234: #{decoder_forward_pallas.1} parent=1 // pred_check
      _
    $region235: #{decoder_forward_pallas.1} parent=1 // pred_check_branch
      %432 = sbr.rel (%p429) target = $region237
    $region236: #{decoder_forward_pallas.1} parent=1 // pred_region
      %s447 = sand.u32 1, 7
      %p448 = scmp.eq.s32.totalorder %s447, 0
      %p449 = pneg %p448
      // Predicated region
      $region249: #{decoder_forward_pallas.1} parent=236 // pred_check
        _
      $region250: #{decoder_forward_pallas.1} parent=236 // pred_check_branch
        %451 = sbr.rel (%p448) target = $region252
      $region251: #{decoder_forward_pallas.1} parent=236 // pred_region
        %s452 = sand.u32 1, 7
        %s453 = ssub.s32 1, %s452
        %s454 = scalar_lea.vmem %s425, %s453
        %s455 = ssub.s32 1, %s452
        %s456 = scalar_lea.vmem %s426, %s455 [#allocation2]
        %s457 = sshllo.u32 0, %s452
        loop: start=0, step=1, limit=1
        $region253: #{decoder_forward_pallas.1} parent=251 // loop_pre_header
          _
        $region254: #{decoder_forward_pallas.1} parent=251 // loop_header
          %s459 = sphi 0, %s463
          %p460 = scmp.ge.s32.totalorder %s459, 1
          %s464 = sphi %s454, %s454
          %s465 = sphi %s456, %s456
        $region255: #{decoder_forward_pallas.1} parent=251 // loop_header_branch
          %462 = sbr.rel (%p460) target = $region259
        $region256: #{decoder_forward_pallas.1} parent=251 // loop_body
          %v466 = vld [vmem:[%s464] sm:%s457]
          %467 = vst [vmem:[%s465] sm:%s457] %v466
        $region257: #{decoder_forward_pallas.1} parent=251 // loop_footer
          %s463 = sadd.s32 1, %s459
        $region258: #{decoder_forward_pallas.1} parent=251 // loop_footer_branch
          %458 = sbr.rel target = $region254
        $region259: #{decoder_forward_pallas.1} parent=251 // loop_exit
          _
      $region252: #{decoder_forward_pallas.1} parent=236 // pred_fallthru
        _
    $region237: #{decoder_forward_pallas.1} parent=1 // pred_fallthru
      _
    // Predicated region
    $region238: #{decoder_forward_pallas.1} parent=1 // pred_check
      %p433 = pneg %p429
    $region239: #{decoder_forward_pallas.1} parent=1 // pred_check_branch
      %435 = sbr.rel (%p433) target = $region241
    $region240: #{decoder_forward_pallas.1} parent=1 // pred_region
      %s436 = sshllo.u32 0, 1
      loop: start=0, step=1, limit=1
      $region242: #{decoder_forward_pallas.1} parent=240 // loop_pre_header
        _
      $region243: #{decoder_forward_pallas.1} parent=240 // loop_header
        %s438 = sphi 0, %s442
        %p439 = scmp.ge.s32.totalorder %s438, 1
        %s443 = sphi %s425, %s425
        %s444 = sphi %s426, %s426
      $region244: #{decoder_forward_pallas.1} parent=240 // loop_header_branch
        %441 = sbr.rel (%p439) target = $region248
      $region245: #{decoder_forward_pallas.1} parent=240 // loop_body
        %v445 = vld [vmem:[%s443] sm:%s436]
        %446 = vst [vmem:[%s444] sm:%s436] %v445
      $region246: #{decoder_forward_pallas.1} parent=240 // loop_footer
        %s442 = sadd.s32 1, %s438
      $region247: #{decoder_forward_pallas.1} parent=240 // loop_footer_branch
        %437 = sbr.rel target = $region243
      $region248: #{decoder_forward_pallas.1} parent=240 // loop_exit
        _
    $region241: #{decoder_forward_pallas.1} parent=1 // pred_fallthru
      _
    // Predicated region
    $region260: #{decoder_forward_pallas.1} parent=1 // pred_check
      _
    $region261: #{decoder_forward_pallas.1} parent=1 // pred_check_branch
      %470 = sbr.rel (0) target = $region263
    $region262: #{decoder_forward_pallas.1} parent=1 // pred_region
      %471 = vsyncadd %s427, 16
    $region263: #{decoder_forward_pallas.1} parent=1 // pred_fallthru
      _
    %s472 = sld [smem:[#allocation4 + $0x5]]
    %p473 = scmp.gt.s32.totalorder %s472, 0
    %s474 = scalar_select %p473, %s472, 0
    %p475 = scmp.lt.s32.totalorder %s474, 31
    %s476 = scalar_select %p475, %s474, 31
    %s477 = scalar_lea.vmem %s1, %s476
    %s478 = scalar_lea.vmem [#allocation2], 5
    %s479 = scalar_lea.sflag [#allocation3], 5
    %p481 = scmp.lt.u32.totalorder 1, 8
    %p482 = pneg %p481
    // Predicated region
    $region264: #{decoder_forward_pallas.1} parent=1 // pred_check
      _
    $region265: #{decoder_forward_pallas.1} parent=1 // pred_check_branch
      %484 = sbr.rel (%p481) target = $region267
    $region266: #{decoder_forward_pallas.1} parent=1 // pred_region
      %s499 = sand.u32 1, 7
      %p500 = scmp.eq.s32.totalorder %s499, 0
      %p501 = pneg %p500
      // Predicated region
      $region279: #{decoder_forward_pallas.1} parent=266 // pred_check
        _
      $region280: #{decoder_forward_pallas.1} parent=266 // pred_check_branch
        %503 = sbr.rel (%p500) target = $region282
      $region281: #{decoder_forward_pallas.1} parent=266 // pred_region
        %s504 = sand.u32 1, 7
        %s505 = ssub.s32 1, %s504
        %s506 = scalar_lea.vmem %s477, %s505
        %s507 = ssub.s32 1, %s504
        %s508 = scalar_lea.vmem %s478, %s507 [#allocation2]
        %s509 = sshllo.u32 0, %s504
        loop: start=0, step=1, limit=1
        $region283: #{decoder_forward_pallas.1} parent=281 // loop_pre_header
          _
        $region284: #{decoder_forward_pallas.1} parent=281 // loop_header
          %s511 = sphi 0, %s515
          %p512 = scmp.ge.s32.totalorder %s511, 1
          %s516 = sphi %s506, %s506
          %s517 = sphi %s508, %s508
        $region285: #{decoder_forward_pallas.1} parent=281 // loop_header_branch
          %514 = sbr.rel (%p512) target = $region289
        $region286: #{decoder_forward_pallas.1} parent=281 // loop_body
          %v518 = vld [vmem:[%s516] sm:%s509]
          %519 = vst [vmem:[%s517] sm:%s509] %v518
        $region287: #{decoder_forward_pallas.1} parent=281 // loop_footer
          %s515 = sadd.s32 1, %s511
        $region288: #{decoder_forward_pallas.1} parent=281 // loop_footer_branch
          %510 = sbr.rel target = $region284
        $region289: #{decoder_forward_pallas.1} parent=281 // loop_exit
          _
      $region282: #{decoder_forward_pallas.1} parent=266 // pred_fallthru
        _
    $region267: #{decoder_forward_pallas.1} parent=1 // pred_fallthru
      _
    // Predicated region
    $region268: #{decoder_forward_pallas.1} parent=1 // pred_check
      %p485 = pneg %p481
    $region269: #{decoder_forward_pallas.1} parent=1 // pred_check_branch
      %487 = sbr.rel (%p485) target = $region271
    $region270: #{decoder_forward_pallas.1} parent=1 // pred_region
      %s488 = sshllo.u32 0, 1
      loop: start=0, step=1, limit=1
      $region272: #{decoder_forward_pallas.1} parent=270 // loop_pre_header
        _
      $region273: #{decoder_forward_pallas.1} parent=270 // loop_header
        %s490 = sphi 0, %s494
        %p491 = scmp.ge.s32.totalorder %s490, 1
        %s495 = sphi %s477, %s477
        %s496 = sphi %s478, %s478
      $region274: #{decoder_forward_pallas.1} parent=270 // loop_header_branch
        %493 = sbr.rel (%p491) target = $region278
      $region275: #{decoder_forward_pallas.1} parent=270 // loop_body
        %v497 = vld [vmem:[%s495] sm:%s488]
        %498 = vst [vmem:[%s496] sm:%s488] %v497
      $region276: #{decoder_forward_pallas.1} parent=270 // loop_footer
        %s494 = sadd.s32 1, %s490
      $region277: #{decoder_forward_pallas.1} parent=270 // loop_footer_branch
        %489 = sbr.rel target = $region273
      $region278: #{decoder_forward_pallas.1} parent=270 // loop_exit
        _
    $region271: #{decoder_forward_pallas.1} parent=1 // pred_fallthru
      _
    // Predicated region
    $region290: #{decoder_forward_pallas.1} parent=1 // pred_check
      _
    $region291: #{decoder_forward_pallas.1} parent=1 // pred_check_branch
      %522 = sbr.rel (0) target = $region293
    $region292: #{decoder_forward_pallas.1} parent=1 // pred_region
      %523 = vsyncadd %s479, 16
    $region293: #{decoder_forward_pallas.1} parent=1 // pred_fallthru
      _
    %s524 = sld [smem:[#allocation4 + $0x6]]
    %p525 = scmp.gt.s32.totalorder %s524, 0
    %s526 = scalar_select %p525, %s524, 0
    %p527 = scmp.lt.s32.totalorder %s526, 31
    %s528 = scalar_select %p527, %s526, 31
    %s529 = scalar_lea.vmem %s1, %s528
    %s530 = scalar_lea.vmem [#allocation2], 6
    %s531 = scalar_lea.sflag [#allocation3], 6
    %p533 = scmp.lt.u32.totalorder 1, 8
    %p534 = pneg %p533
    // Predicated region
    $region294: #{decoder_forward_pallas.1} parent=1 // pred_check
      _
    $region295: #{decoder_forward_pallas.1} parent=1 // pred_check_branch
      %536 = sbr.rel (%p533) target = $region297
    $region296: #{decoder_forward_pallas.1} parent=1 // pred_region
      %s551 = sand.u32 1, 7
      %p552 = scmp.eq.s32.totalorder %s551, 0
      %p553 = pneg %p552
      // Predicated region
      $region309: #{decoder_forward_pallas.1} parent=296 // pred_check
        _
      $region310: #{decoder_forward_pallas.1} parent=296 // pred_check_branch
        %555 = sbr.rel (%p552) target = $region312
      $region311: #{decoder_forward_pallas.1} parent=296 // pred_region
        %s556 = sand.u32 1, 7
        %s557 = ssub.s32 1, %s556
        %s558 = scalar_lea.vmem %s529, %s557
        %s559 = ssub.s32 1, %s556
        %s560 = scalar_lea.vmem %s530, %s559 [#allocation2]
        %s561 = sshllo.u32 0, %s556
        loop: start=0, step=1, limit=1
        $region313: #{decoder_forward_pallas.1} parent=311 // loop_pre_header
          _
        $region314: #{decoder_forward_pallas.1} parent=311 // loop_header
          %s563 = sphi 0, %s567
          %p564 = scmp.ge.s32.totalorder %s563, 1
          %s568 = sphi %s558, %s558
          %s569 = sphi %s560, %s560
        $region315: #{decoder_forward_pallas.1} parent=311 // loop_header_branch
          %566 = sbr.rel (%p564) target = $region319
        $region316: #{decoder_forward_pallas.1} parent=311 // loop_body
          %v570 = vld [vmem:[%s568] sm:%s561]
          %571 = vst [vmem:[%s569] sm:%s561] %v570
        $region317: #{decoder_forward_pallas.1} parent=311 // loop_footer
          %s567 = sadd.s32 1, %s563
        $region318: #{decoder_forward_pallas.1} parent=311 // loop_footer_branch
          %562 = sbr.rel target = $region314
        $region319: #{decoder_forward_pallas.1} parent=311 // loop_exit
          _
      $region312: #{decoder_forward_pallas.1} parent=296 // pred_fallthru
        _
    $region297: #{decoder_forward_pallas.1} parent=1 // pred_fallthru
      _
    // Predicated region
    $region298: #{decoder_forward_pallas.1} parent=1 // pred_check
      %p537 = pneg %p533
    $region299: #{decoder_forward_pallas.1} parent=1 // pred_check_branch
      %539 = sbr.rel (%p537) target = $region301
    $region300: #{decoder_forward_pallas.1} parent=1 // pred_region
      %s540 = sshllo.u32 0, 1
      loop: start=0, step=1, limit=1
      $region302: #{decoder_forward_pallas.1} parent=300 // loop_pre_header
        _
      $region303: #{decoder_forward_pallas.1} parent=300 // loop_header
        %s542 = sphi 0, %s546
        %p543 = scmp.ge.s32.totalorder %s542, 1
        %s547 = sphi %s529, %s529
        %s548 = sphi %s530, %s530
      $region304: #{decoder_forward_pallas.1} parent=300 // loop_header_branch
        %545 = sbr.rel (%p543) target = $region308
      $region305: #{decoder_forward_pallas.1} parent=300 // loop_body
        %v549 = vld [vmem:[%s547] sm:%s540]
        %550 = vst [vmem:[%s548] sm:%s540] %v549
      $region306: #{decoder_forward_pallas.1} parent=300 // loop_footer
        %s546 = sadd.s32 1, %s542
      $region307: #{decoder_forward_pallas.1} parent=300 // loop_footer_branch
        %541 = sbr.rel target = $region303
      $region308: #{decoder_forward_pallas.1} parent=300 // loop_exit
        _
    $region301: #{decoder_forward_pallas.1} parent=1 // pred_fallthru
      _
    // Predicated region
    $region320: #{decoder_forward_pallas.1} parent=1 // pred_check
      _
    $region321: #{decoder_forward_pallas.1} parent=1 // pred_check_branch
      %574 = sbr.rel (0) target = $region323
    $region322: #{decoder_forward_pallas.1} parent=1 // pred_region
      %575 = vsyncadd %s531, 16
    $region323: #{decoder_forward_pallas.1} parent=1 // pred_fallthru
      _
    %s576 = sld [smem:[#allocation4 + $0x7]]
    %p577 = scmp.gt.s32.totalorder %s576, 0
    %s578 = scalar_select %p577, %s576, 0
    %p579 = scmp.lt.s32.totalorder %s578, 31
    %s580 = scalar_select %p579, %s578, 31
    %s581 = scalar_lea.vmem %s1, %s580
    %s582 = scalar_lea.vmem [#allocation2], 7
    %s583 = scalar_lea.sflag [#allocation3], 7
    %p585 = scmp.lt.u32.totalorder 1, 8
    %p586 = pneg %p585
    // Predicated region
    $region324: #{decoder_forward_pallas.1} parent=1 // pred_check
      _
    $region325: #{decoder_forward_pallas.1} parent=1 // pred_check_branch
      %588 = sbr.rel (%p585) target = $region327
    $region326: #{decoder_forward_pallas.1} parent=1 // pred_region
      %s603 = sand.u32 1, 7
      %p604 = scmp.eq.s32.totalorder %s603, 0
      %p605 = pneg %p604
      // Predicated region
      $region339: #{decoder_forward_pallas.1} parent=326 // pred_check
        _
      $region340: #{decoder_forward_pallas.1} parent=326 // pred_check_branch
        %607 = sbr.rel (%p604) target = $region342
      $region341: #{decoder_forward_pallas.1} parent=326 // pred_region
        %s608 = sand.u32 1, 7
        %s609 = ssub.s32 1, %s608
        %s610 = scalar_lea.vmem %s581, %s609
        %s611 = ssub.s32 1, %s608
        %s612 = scalar_lea.vmem %s582, %s611 [#allocation2]
        %s613 = sshllo.u32 0, %s608
        loop: start=0, step=1, limit=1
        $region343: #{decoder_forward_pallas.1} parent=341 // loop_pre_header
          _
        $region344: #{decoder_forward_pallas.1} parent=341 // loop_header
          %s615 = sphi 0, %s619
          %p616 = scmp.ge.s32.totalorder %s615, 1
          %s620 = sphi %s610, %s610
          %s621 = sphi %s612, %s612
        $region345: #{decoder_forward_pallas.1} parent=341 // loop_header_branch
          %618 = sbr.rel (%p616) target = $region349
        $region346: #{decoder_forward_pallas.1} parent=341 // loop_body
          %v622 = vld [vmem:[%s620] sm:%s613]
          %623 = vst [vmem:[%s621] sm:%s613] %v622
        $region347: #{decoder_forward_pallas.1} parent=341 // loop_footer
          %s619 = sadd.s32 1, %s615
        $region348: #{decoder_forward_pallas.1} parent=341 // loop_footer_branch
          %614 = sbr.rel target = $region344
        $region349: #{decoder_forward_pallas.1} parent=341 // loop_exit
          _
      $region342: #{decoder_forward_pallas.1} parent=326 // pred_fallthru
        _
    $region327: #{decoder_forward_pallas.1} parent=1 // pred_fallthru
      _
    // Predicated region
    $region328: #{decoder_forward_pallas.1} parent=1 // pred_check
      %p589 = pneg %p585
    $region329: #{decoder_forward_pallas.1} parent=1 // pred_check_branch
      %591 = sbr.rel (%p589) target = $region331
    $region330: #{decoder_forward_pallas.1} parent=1 // pred_region
      %s592 = sshllo.u32 0, 1
      loop: start=0, step=1, limit=1
      $region332: #{decoder_forward_pallas.1} parent=330 // loop_pre_header
        _
      $region333: #{decoder_forward_pallas.1} parent=330 // loop_header
        %s594 = sphi 0, %s598
        %p595 = scmp.ge.s32.totalorder %s594, 1
        %s599 = sphi %s581, %s581
        %s600 = sphi %s582, %s582
      $region334: #{decoder_forward_pallas.1} parent=330 // loop_header_branch
        %597 = sbr.rel (%p595) target = $region338
      $region335: #{decoder_forward_pallas.1} parent=330 // loop_body
        %v601 = vld [vmem:[%s599] sm:%s592]
        %602 = vst [vmem:[%s600] sm:%s592] %v601
      $region336: #{decoder_forward_pallas.1} parent=330 // loop_footer
        %s598 = sadd.s32 1, %s594
      $region337: #{decoder_forward_pallas.1} parent=330 // loop_footer_branch
        %593 = sbr.rel target = $region333
      $region338: #{decoder_forward_pallas.1} parent=330 // loop_exit
        _
    $region331: #{decoder_forward_pallas.1} parent=1 // pred_fallthru
      _
    // Predicated region
    $region350: #{decoder_forward_pallas.1} parent=1 // pred_check
      _
    $region351: #{decoder_forward_pallas.1} parent=1 // pred_check_branch
      %626 = sbr.rel (0) target = $region353
    $region352: #{decoder_forward_pallas.1} parent=1 // pred_region
      %627 = vsyncadd %s583, 16
    $region353: #{decoder_forward_pallas.1} parent=1 // pred_fallthru
      _
    %s628 = smul.u32 1, 1
    %s629 = sshll.u32 %s628, 4
    %630 = dma.done [#allocation3], %s629
    %s631 = sshll.u32 %s628, 4
    %632 = dma.done %s271, %s631
    %s633 = sshll.u32 %s628, 4
    %634 = dma.done %s323, %s633
    %s635 = sshll.u32 %s628, 4
    %636 = dma.done %s375, %s635
    %s637 = sshll.u32 %s628, 4
    %638 = dma.done %s427, %s637
    %s639 = sshll.u32 %s628, 4
    %640 = dma.done %s479, %s639
    %s641 = sshll.u32 %s628, 4
    %642 = dma.done %s531, %s641
    %s643 = sshll.u32 %s628, 4
    %644 = dma.done %s583, %s643
    %v645 = vld [vmem:[#allocation2] sm:$0xff]
    %v646 = vpack.c.bf16 %v645, %v645
    %v647 = vld [vmem:[%s3] sm:$0xff]
    %v648 = vld [vmem:[%s3 + $0x8] sm:$0xff]
    %v649 = vld [vmem:[%s3 + $0x10] sm:$0xff]
    %v650 = vld [vmem:[%s3 + $0x18] sm:$0xff]
    %v651 = vld [vmem:[%s3 + $0x20] sm:$0xff]
    %v652 = vld [vmem:[%s3 + $0x28] sm:$0xff]
    %v653 = vld [vmem:[#allocation11] sm:$0x3f]
    %v655 = vlaneseq
    %v656 = vshrl.u32 %v655, 7
    %v657 = vsub.s32 0, %v656
    %v658 = vrot.slane %v653, %v657
    %v659 = vlaneseq
    %v660 = vshrl.u32 %v659, 7
    %v661 = vsub.s32 1, %v660
    %v662 = vrot.slane %v653, %v661
    %v663 = vlaneseq
    %v664 = vshrl.u32 %v663, 7
    %v665 = vsub.s32 2, %v664
    %v666 = vrot.slane %v653, %v665
    %v667 = vlaneseq
    %v668 = vshrl.u32 %v667, 7
    %v669 = vsub.s32 3, %v668
    %v670 = vrot.slane %v653, %v669
    %v671 = vlaneseq
    %v672 = vshrl.u32 %v671, 7
    %v673 = vsub.s32 4, %v672
    %v674 = vrot.slane %v653, %v673
    %v675 = vlaneseq
    %v676 = vshrl.u32 %v675, 7
    %v677 = vsub.s32 5, %v676
    %v678 = vrot.slane %v653, %v677
    %v691 = vunpack.c.l.b16 %v647
    %v692 = vunpack.c.h.b16 %v647
    %v693 = vunpack.c.l.b16 %v648
    %v694 = vunpack.c.h.b16 %v648
    %v695 = vunpack.c.l.b16 %v649
    %v696 = vunpack.c.h.b16 %v649
    %v697 = vunpack.c.l.b16 %v650
    %v698 = vunpack.c.h.b16 %v650
    %v699 = vunpack.c.l.b16 %v651
    %v700 = vunpack.c.h.b16 %v651
    %v701 = vunpack.c.l.b16 %v652
    %v702 = vunpack.c.h.b16 %v652
    %v703 = vpack.c.b16 %v697, %v691
    %v704 = vpack.c.b16 %v698, %v692
    %v705 = vpack.c.b16 %v699, %v693
    %v706 = vpack.c.b16 %v700, %v694
    %v707 = vpack.c.b16 %v701, %v695
    %v708 = vpack.c.b16 %v702, %v696
    %vm715 = vcmask 130048
    %v717 = vsel %vm715, %v646, 0
    %719 = vmatprep.subr.bf16.mxu0 %v704
    %720 = vmatpush1.bf16.msra.mxu0 %v703
    %721 = vmatprep.subr.bf16.mxu0 0
    %722 = vmatpush1.bf16.msra.mxu0 0
    %723 = vmatprep.subr.bf16.mxu0 0
    %724 = vmatpush1.bf16.msra.mxu0 0
    %725 = vmatprep.subr.bf16.mxu0 0
    %726 = vmatpush1.bf16.msra.mxu0 0
    %727 = vmatprep.subr.bf16.mxu0 0
    %728 = vmatpush1.bf16.msra.mxu0 0
    %729 = vmatprep.subr.bf16.mxu0 0
    %730 = vmatpush1.bf16.msra.mxu0 0
    %731 = vmatprep.subr.bf16.mxu0 0
    %732 = vmatpush1.bf16.msra.mxu0 0
    %733 = vmatprep.subr.bf16.mxu0 0
    %734 = vmatpush1.bf16.msra.mxu0 0
    %735 = vmatprep.subr.bf16.mxu0 0
    %736 = vmatpush1.bf16.msra.mxu0 0
    %737 = vmatprep.subr.bf16.mxu0 0
    %738 = vmatpush1.bf16.msra.mxu0 0
    %739 = vmatprep.subr.bf16.mxu0 0
    %740 = vmatpush1.bf16.msra.mxu0 0
    %741 = vmatprep.subr.bf16.mxu0 0
    %742 = vmatpush1.bf16.msra.mxu0 0
    %743 = vmatprep.subr.bf16.mxu0 0
    %744 = vmatpush1.bf16.msra.mxu0 0
    %745 = vmatprep.subr.bf16.mxu0 0
    %746 = vmatpush1.bf16.msra.mxu0 0
    %747 = vmatprep.subr.bf16.mxu0 0
    %748 = vmatpush1.bf16.msra.mxu0 0
    %749 = vmatprep.subr.bf16.mxu0 0
    %750 = vmatpush1.bf16.msra.mxu0 0
    %751 = vmatprep.mubr.bf16.mxu0 0
    %752 = vmatmul.mubr.bf16.gmra.mrb[0].mxu0 %v717
    %v753 = vpop.f32.mrb[0].mxu0
    %v754 = vadd.f32 %v658, %v753
    %v755 = vpop.f32.mrb[0].mxu0
    %v756 = vadd.f32 %v662, %v755
    %v757 = vpop.f32.mrb[0].mxu0
    %v758 = vpop.f32.mrb[0].mxu0
    %759 = vdwg.mxu0
    %760 = vmatprep.subr.bf16.mxu0 %v706
    %761 = vmatpush1.bf16.msra.mxu0 %v705
    %762 = vmatprep.subr.bf16.mxu0 0
    %763 = vmatpush1.bf16.msra.mxu0 0
    %764 = vmatprep.subr.bf16.mxu0 0
    %765 = vmatpush1.bf16.msra.mxu0 0
    %766 = vmatprep.subr.bf16.mxu0 0
    %767 = vmatpush1.bf16.msra.mxu0 0
    %768 = vmatprep.subr.bf16.mxu0 0
    %769 = vmatpush1.bf16.msra.mxu0 0
    %770 = vmatprep.subr.bf16.mxu0 0
    %771 = vmatpush1.bf16.msra.mxu0 0
    %772 = vmatprep.subr.bf16.mxu0 0
    %773 = vmatpush1.bf16.msra.mxu0 0
    %774 = vmatprep.subr.bf16.mxu0 0
    %775 = vmatpush1.bf16.msra.mxu0 0
    %776 = vmatprep.subr.bf16.mxu0 0
    %777 = vmatpush1.bf16.msra.mxu0 0
    %778 = vmatprep.subr.bf16.mxu0 0
    %779 = vmatpush1.bf16.msra.mxu0 0
    %780 = vmatprep.subr.bf16.mxu0 0
    %781 = vmatpush1.bf16.msra.mxu0 0
    %782 = vmatprep.subr.bf16.mxu0 0
    %783 = vmatpush1.bf16.msra.mxu0 0
    %784 = vmatprep.subr.bf16.mxu0 0
    %785 = vmatpush1.bf16.msra.mxu0 0
    %786 = vmatprep.subr.bf16.mxu0 0
    %787 = vmatpush1.bf16.msra.mxu0 0
    %788 = vmatprep.subr.bf16.mxu0 0
    %789 = vmatpush1.bf16.msra.mxu0 0
    %790 = vmatprep.subr.bf16.mxu0 0
    %791 = vmatpush1.bf16.msra.mxu0 0
    %792 = vmatprep.mubr.bf16.mxu0 0
    %793 = vmatmul.mubr.bf16.gmra.mrb[0].mxu0 %v717
    %v794 = vpop.f32.mrb[0].mxu0
    %v795 = vadd.f32 %v666, %v794
    %v796 = vpop.f32.mrb[0].mxu0
    %v797 = vadd.f32 %v670, %v796
    %v798 = vpop.f32.mrb[0].mxu0
    %v799 = vpop.f32.mrb[0].mxu0
    %800 = vdwg.mxu0
    %801 = vmatprep.subr.bf16.mxu0 %v708
    %802 = vmatpush1.bf16.msra.mxu0 %v707
    %803 = vmatprep.subr.bf16.mxu0 0
    %804 = vmatpush1.bf16.msra.mxu0 0
    %805 = vmatprep.subr.bf16.mxu0 0
    %806 = vmatpush1.bf16.msra.mxu0 0
    %807 = vmatprep.subr.bf16.mxu0 0
    %808 = vmatpush1.bf16.msra.mxu0 0
    %809 = vmatprep.subr.bf16.mxu0 0
    %810 = vmatpush1.bf16.msra.mxu0 0
    %811 = vmatprep.subr.bf16.mxu0 0
    %812 = vmatpush1.bf16.msra.mxu0 0
    %813 = vmatprep.subr.bf16.mxu0 0
    %814 = vmatpush1.bf16.msra.mxu0 0
    %815 = vmatprep.subr.bf16.mxu0 0
    %816 = vmatpush1.bf16.msra.mxu0 0
    %817 = vmatprep.subr.bf16.mxu0 0
    %818 = vmatpush1.bf16.msra.mxu0 0
    %819 = vmatprep.subr.bf16.mxu0 0
    %820 = vmatpush1.bf16.msra.mxu0 0
    %821 = vmatprep.subr.bf16.mxu0 0
    %822 = vmatpush1.bf16.msra.mxu0 0
    %823 = vmatprep.subr.bf16.mxu0 0
    %824 = vmatpush1.bf16.msra.mxu0 0
    %825 = vmatprep.subr.bf16.mxu0 0
    %826 = vmatpush1.bf16.msra.mxu0 0
    %827 = vmatprep.subr.bf16.mxu0 0
    %828 = vmatpush1.bf16.msra.mxu0 0
    %829 = vmatprep.subr.bf16.mxu0 0
    %830 = vmatpush1.bf16.msra.mxu0 0
    %831 = vmatprep.subr.bf16.mxu0 0
    %832 = vmatpush1.bf16.msra.mxu0 0
    %833 = vmatprep.mubr.bf16.mxu0 0
    %834 = vmatmul.mubr.bf16.gmra.mrb[0].mxu0 %v717
    %v835 = vpop.f32.mrb[0].mxu0
    %v836 = vadd.f32 %v674, %v835
    %v837 = vpop.f32.mrb[0].mxu0
    %v838 = vadd.f32 %v678, %v837
    %v839 = vpop.f32.mrb[0].mxu0
    %v840 = vpop.f32.mrb[0].mxu0
    %841 = vdwg.mxu0
    %v842 = vpack.c.bf16 %v207, %v207
    %v843 = vld [vmem:[%s7] sm:$0xff]
    %v844 = vld [vmem:[%s7 + $0x8] sm:$0xf]
    %v845 = vld [vmem:[%s7 + $0xc] sm:$0xff]
    %v846 = vld [vmem:[%s7 + $0x14] sm:$0xf]
    %v847 = vld [vmem:[%s7 + $0x18] sm:$0xff]
    %v848 = vld [vmem:[%s7 + $0x20] sm:$0xf]
    %v849 = vld [vmem:[%s7 + $0x24] sm:$0xff]
    %v850 = vld [vmem:[%s7 + $0x2c] sm:$0xf]
    %v859 = vunpack.c.l.b16 %v843
    %v860 = vunpack.c.h.b16 %v843
    %v861 = vunpack.c.l.b16 %v844
    %v862 = vunpack.c.l.b16 %v845
    %v863 = vunpack.c.h.b16 %v845
    %v864 = vunpack.c.l.b16 %v846
    %v865 = vunpack.c.l.b16 %v847
    %v866 = vunpack.c.h.b16 %v847
    %v867 = vunpack.c.l.b16 %v848
    %v868 = vunpack.c.l.b16 %v849
    %v869 = vunpack.c.h.b16 %v849
    %v870 = vunpack.c.l.b16 %v850
    %v871 = vpack.c.b16 %v862, %v859
    %v872 = vpack.c.b16 %v863, %v860
    %v873 = vpack.c.b16 %v864, %v861
    %v874 = vpack.c.b16 %v868, %v865
    %v875 = vpack.c.b16 %v869, %v866
    %v876 = vpack.c.b16 %v870, %v867
    %vm883 = vcmask 261120
    %v885 = vsel %vm883, %v842, 0
    %887 = vmatprep.subr.bf16.mxu0 %v872
    %888 = vmatpush1.bf16.msra.mxu0 %v871
    %889 = vmatprep.subr.bf16.mxu0 %v875
    %890 = vmatpush1.bf16.msra.mxu0 %v874
    %891 = vmatprep.subr.bf16.mxu0 0
    %892 = vmatpush1.bf16.msra.mxu0 0
    %893 = vmatprep.subr.bf16.mxu0 0
    %894 = vmatpush1.bf16.msra.mxu0 0
    %895 = vmatprep.subr.bf16.mxu0 0
    %896 = vmatpush1.bf16.msra.mxu0 0
    %897 = vmatprep.subr.bf16.mxu0 0
    %898 = vmatpush1.bf16.msra.mxu0 0
    %899 = vmatprep.subr.bf16.mxu0 0
    %900 = vmatpush1.bf16.msra.mxu0 0
    %901 = vmatprep.subr.bf16.mxu0 0
    %902 = vmatpush1.bf16.msra.mxu0 0
    %903 = vmatprep.subr.bf16.mxu0 0
    %904 = vmatpush1.bf16.msra.mxu0 0
    %905 = vmatprep.subr.bf16.mxu0 0
    %906 = vmatpush1.bf16.msra.mxu0 0
    %907 = vmatprep.subr.bf16.mxu0 0
    %908 = vmatpush1.bf16.msra.mxu0 0
    %909 = vmatprep.subr.bf16.mxu0 0
    %910 = vmatpush1.bf16.msra.mxu0 0
    %911 = vmatprep.subr.bf16.mxu0 0
    %912 = vmatpush1.bf16.msra.mxu0 0
    %913 = vmatprep.subr.bf16.mxu0 0
    %914 = vmatpush1.bf16.msra.mxu0 0
    %915 = vmatprep.subr.bf16.mxu0 0
    %916 = vmatpush1.bf16.msra.mxu0 0
    %917 = vmatprep.subr.bf16.mxu0 0
    %918 = vmatpush1.bf16.msra.mxu0 0
    %919 = vmatprep.mubr.bf16.mxu0 0
    %920 = vmatmul.mubr.bf16.gmra.mrb[0].mxu0 %v885
    %v921 = vpop.f32.mrb[0].mxu0
    %v922 = vadd.f32 0.0, %v921
    %v923 = vpop.f32.mrb[0].mxu0
    %v924 = vadd.f32 0.0, %v923
    %v925 = vpop.f32.mrb[0].mxu0
    %v926 = vpop.f32.mrb[0].mxu0
    %927 = vdwg.mxu0
    %928 = vmatprep.subr.bf16.mxu0 0
    %929 = vmatpush1.bf16.msra.mxu0 %v873
    %930 = vmatprep.subr.bf16.mxu0 0
    %931 = vmatpush1.bf16.msra.mxu0 %v876
    %932 = vmatprep.subr.bf16.mxu0 0
    %933 = vmatpush1.bf16.msra.mxu0 0
    %934 = vmatprep.subr.bf16.mxu0 0
    %935 = vmatpush1.bf16.msra.mxu0 0
    %936 = vmatprep.subr.bf16.mxu0 0
    %937 = vmatpush1.bf16.msra.mxu0 0
    %938 = vmatprep.subr.bf16.mxu0 0
    %939 = vmatpush1.bf16.msra.mxu0 0
    %940 = vmatprep.subr.bf16.mxu0 0
    %941 = vmatpush1.bf16.msra.mxu0 0
    %942 = vmatprep.subr.bf16.mxu0 0
    %943 = vmatpush1.bf16.msra.mxu0 0
    %944 = vmatprep.subr.bf16.mxu0 0
    %945 = vmatpush1.bf16.msra.mxu0 0
    %946 = vmatprep.subr.bf16.mxu0 0
    %947 = vmatpush1.bf16.msra.mxu0 0
    %948 = vmatprep.subr.bf16.mxu0 0
    %949 = vmatpush1.bf16.msra.mxu0 0
    %950 = vmatprep.subr.bf16.mxu0 0
    %951 = vmatpush1.bf16.msra.mxu0 0
    %952 = vmatprep.subr.bf16.mxu0 0
    %953 = vmatpush1.bf16.msra.mxu0 0
    %954 = vmatprep.subr.bf16.mxu0 0
    %955 = vmatpush1.bf16.msra.mxu0 0
    %956 = vmatprep.subr.bf16.mxu0 0
    %957 = vmatpush1.bf16.msra.mxu0 0
    %958 = vmatprep.subr.bf16.mxu0 0
    %959 = vmatpush1.bf16.msra.mxu0 0
    %960 = vmatprep.mubr.bf16.mxu0 0
    %961 = vmatmul.mubr.bf16.gmra.mrb[0].mxu0 %v885
    %v962 = vpop.f32.mrb[0].mxu0
    %v963 = vadd.f32 0.0, %v962
    %v964 = vpop.f32.mrb[0].mxu0
    %v965 = vpop.f32.mrb[0].mxu0
    %v966 = vpop.f32.mrb[0].mxu0
    %967 = vdwg.mxu0
    %v968 = vadd.f32 %v754, %v922
    %v969 = vxor.u32 %v968, 2147483648
    %v970 = vmul.f32 %v969, 1.442695
    %v971 = vpow.pop %v970
    %v972 = vadd.f32 %v971, 1.0
    %v973 = vrcp.pop %v972
    %v974 = vmul.f32 1.0, %v973
    %v975 = vadd.f32 %v756, %v924
    %v976 = vxor.u32 %v975, 2147483648
    %v977 = vmul.f32 %v976, 1.442695
    %v978 = vpow.pop %v977
    %v979 = vadd.f32 %v978, 1.0
    %v980 = vrcp.pop %v979
    %v981 = vmul.f32 1.0, %v980
    %v982 = vld [vmem:[#allocation17] sm:$0x1]
    %v984 = vlaneseq
    %v985 = vshrl.u32 %v984, 7
    %v986 = vsub.s32 0, %v985
    %v987 = vrot.slane %v982, %v986
    %v989 = vadd.f32 %v963, %v987
    %v990 = vmul.f32 %v974, %v989
    %v991 = vadd.f32 %v795, %v990
    %v992 = vtanh.pop %v991
    %v993 = vsub.f32 1.0, %v981
    %v994 = vmul.f32 %v993, %v992
    %v995 = vmul.f32 %v981, %v207
    %v996 = vadd.f32 %v994, %v995
    %v997 = vpack.c.bf16 %v209, %v209
    %v998 = vld [vmem:[#allocation14] sm:$0xff]
    %v999 = vld [vmem:[#allocation14 + $0x8] sm:$0xf]
    %v1000 = vld [vmem:[#allocation14 + $0xc] sm:$0xff]
    %v1001 = vld [vmem:[#allocation14 + $0x14] sm:$0xf]
    %v1002 = vld [vmem:[#allocation14 + $0x18] sm:$0xff]
    %v1003 = vld [vmem:[#allocation14 + $0x20] sm:$0xf]
    %v1004 = vld [vmem:[#allocation14 + $0x24] sm:$0xff]
    %v1005 = vld [vmem:[#allocation14 + $0x2c] sm:$0xf]
    %v1014 = vunpack.c.l.b16 %v998
    %v1015 = vunpack.c.h.b16 %v998
    %v1016 = vunpack.c.l.b16 %v999
    %v1017 = vunpack.c.l.b16 %v1000
    %v1018 = vunpack.c.h.b16 %v1000
    %v1019 = vunpack.c.l.b16 %v1001
    %v1020 = vunpack.c.l.b16 %v1002
    %v1021 = vunpack.c.h.b16 %v1002
    %v1022 = vunpack.c.l.b16 %v1003
    %v1023 = vunpack.c.l.b16 %v1004
    %v1024 = vunpack.c.h.b16 %v1004
    %v1025 = vunpack.c.l.b16 %v1005
    %v1026 = vpack.c.b16 %v1017, %v1014
    %v1027 = vpack.c.b16 %v1018, %v1015
    %v1028 = vpack.c.b16 %v1019, %v1016
    %v1029 = vpack.c.b16 %v1023, %v1020
    %v1030 = vpack.c.b16 %v1024, %v1021
    %v1031 = vpack.c.b16 %v1025, %v1022
    %v1039 = vsel %vm883, %v997, 0
    %1041 = vmatprep.subr.bf16.mxu0 %v1027
    %1042 = vmatpush1.bf16.msra.mxu0 %v1026
    %1043 = vmatprep.subr.bf16.mxu0 %v1030
    %1044 = vmatpush1.bf16.msra.mxu0 %v1029
    %1045 = vmatprep.subr.bf16.mxu0 0
    %1046 = vmatpush1.bf16.msra.mxu0 0
    %1047 = vmatprep.subr.bf16.mxu0 0
    %1048 = vmatpush1.bf16.msra.mxu0 0
    %1049 = vmatprep.subr.bf16.mxu0 0
    %1050 = vmatpush1.bf16.msra.mxu0 0
    %1051 = vmatprep.subr.bf16.mxu0 0
    %1052 = vmatpush1.bf16.msra.mxu0 0
    %1053 = vmatprep.subr.bf16.mxu0 0
    %1054 = vmatpush1.bf16.msra.mxu0 0
    %1055 = vmatprep.subr.bf16.mxu0 0
    %1056 = vmatpush1.bf16.msra.mxu0 0
    %1057 = vmatprep.subr.bf16.mxu0 0
    %1058 = vmatpush1.bf16.msra.mxu0 0
    %1059 = vmatprep.subr.bf16.mxu0 0
    %1060 = vmatpush1.bf16.msra.mxu0 0
    %1061 = vmatprep.subr.bf16.mxu0 0
    %1062 = vmatpush1.bf16.msra.mxu0 0
    %1063 = vmatprep.subr.bf16.mxu0 0
    %1064 = vmatpush1.bf16.msra.mxu0 0
    %1065 = vmatprep.subr.bf16.mxu0 0
    %1066 = vmatpush1.bf16.msra.mxu0 0
    %1067 = vmatprep.subr.bf16.mxu0 0
    %1068 = vmatpush1.bf16.msra.mxu0 0
    %1069 = vmatprep.subr.bf16.mxu0 0
    %1070 = vmatpush1.bf16.msra.mxu0 0
    %1071 = vmatprep.subr.bf16.mxu0 0
    %1072 = vmatpush1.bf16.msra.mxu0 0
    %1073 = vmatprep.mubr.bf16.mxu0 0
    %1074 = vmatmul.mubr.bf16.gmra.mrb[0].mxu0 %v1039
    %v1075 = vpop.f32.mrb[0].mxu0
    %v1076 = vadd.f32 0.0, %v1075
    %v1077 = vpop.f32.mrb[0].mxu0
    %v1078 = vadd.f32 0.0, %v1077
    %v1079 = vpop.f32.mrb[0].mxu0
    %v1080 = vpop.f32.mrb[0].mxu0
    %1081 = vdwg.mxu0
    %1082 = vmatprep.subr.bf16.mxu0 0
    %1083 = vmatpush1.bf16.msra.mxu0 %v1028
    %1084 = vmatprep.subr.bf16.mxu0 0
    %1085 = vmatpush1.bf16.msra.mxu0 %v1031
    %1086 = vmatprep.subr.bf16.mxu0 0
    %1087 = vmatpush1.bf16.msra.mxu0 0
    %1088 = vmatprep.subr.bf16.mxu0 0
    %1089 = vmatpush1.bf16.msra.mxu0 0
    %1090 = vmatprep.subr.bf16.mxu0 0
    %1091 = vmatpush1.bf16.msra.mxu0 0
    %1092 = vmatprep.subr.bf16.mxu0 0
    %1093 = vmatpush1.bf16.msra.mxu0 0
    %1094 = vmatprep.subr.bf16.mxu0 0
    %1095 = vmatpush1.bf16.msra.mxu0 0
    %1096 = vmatprep.subr.bf16.mxu0 0
    %1097 = vmatpush1.bf16.msra.mxu0 0
    %1098 = vmatprep.subr.bf16.mxu0 0
    %1099 = vmatpush1.bf16.msra.mxu0 0
    %1100 = vmatprep.subr.bf16.mxu0 0
    %1101 = vmatpush1.bf16.msra.mxu0 0
    %1102 = vmatprep.subr.bf16.mxu0 0
    %1103 = vmatpush1.bf16.msra.mxu0 0
    %1104 = vmatprep.subr.bf16.mxu0 0
    %1105 = vmatpush1.bf16.msra.mxu0 0
    %1106 = vmatprep.subr.bf16.mxu0 0
    %1107 = vmatpush1.bf16.msra.mxu0 0
    %1108 = vmatprep.subr.bf16.mxu0 0
    %1109 = vmatpush1.bf16.msra.mxu0 0
    %1110 = vmatprep.subr.bf16.mxu0 0
    %1111 = vmatpush1.bf16.msra.mxu0 0
    %1112 = vmatprep.subr.bf16.mxu0 0
    %1113 = vmatpush1.bf16.msra.mxu0 0
    %1114 = vmatprep.mubr.bf16.mxu0 0
    %1115 = vmatmul.mubr.bf16.gmra.mrb[0].mxu0 %v1039
    %v1116 = vpop.f32.mrb[0].mxu0
    %v1117 = vadd.f32 0.0, %v1116
    %v1118 = vpop.f32.mrb[0].mxu0
    %v1119 = vpop.f32.mrb[0].mxu0
    %v1120 = vpop.f32.mrb[0].mxu0
    %1121 = vdwg.mxu0
    %v1122 = vadd.f32 %v797, %v1076
    %v1123 = vxor.u32 %v1122, 2147483648
    %v1124 = vmul.f32 %v1123, 1.442695
    %v1125 = vpow.pop %v1124
    %v1126 = vadd.f32 %v1125, 1.0
    %v1127 = vrcp.pop %v1126
    %v1128 = vmul.f32 1.0, %v1127
    %v1129 = vadd.f32 %v836, %v1078
    %v1130 = vxor.u32 %v1129, 2147483648
    %v1131 = vmul.f32 %v1130, 1.442695
    %v1132 = vpow.pop %v1131
    %v1133 = vadd.f32 %v1132, 1.0
    %v1134 = vrcp.pop %v1133
    %v1135 = vmul.f32 1.0, %v1134
    %v1136 = vld [vmem:[#allocation18] sm:$0x1]
    %v1138 = vlaneseq
    %v1139 = vshrl.u32 %v1138, 7
    %v1140 = vsub.s32 0, %v1139
    %v1141 = vrot.slane %v1136, %v1140
    %v1143 = vadd.f32 %v1117, %v1141
    %v1144 = vmul.f32 %v1128, %v1143
    %v1145 = vadd.f32 %v838, %v1144
    %v1146 = vtanh.pop %v1145
    %v1147 = vsub.f32 1.0, %v1135
    %v1148 = vmul.f32 %v1147, %v1146
    %v1149 = vmul.f32 %v1135, %v209
    %v1150 = vadd.f32 %v1148, %v1149
    %1152 = vrot.lane.b32.xlu0 %v1150, 32
    %v1153 = vpop.permute.xlu0 %1152
    %v1155 = vsel %vm883, %v996, %v1153
    %v1156 = vpack.c.bf16 %v1155, %v1155
    %v1157 = vld [vmem:[#allocation9] sm:$0xff]
    %v1158 = vld [vmem:[#allocation9 + $0x8] sm:$0xff]
    %v1159 = vld [vmem:[#allocation9 + $0x10] sm:$0xff]
    %v1160 = vld [vmem:[#allocation9 + $0x18] sm:$0xff]
    %v1161 = vld [vmem:[#allocation9 + $0x20] sm:$0xff]
    %v1162 = vld [vmem:[#allocation9 + $0x28] sm:$0xff]
    %v1163 = vld [vmem:[#allocation9 + $0x30] sm:$0xff]
    %v1164 = vld [vmem:[#allocation9 + $0x38] sm:$0xff]
    %v1165 = vld [vmem:[#allocation9 + $0x40] sm:$0xff]
    %v1166 = vld [vmem:[#allocation9 + $0x48] sm:$0xff]
    %v1167 = vld [vmem:[#allocation9 + $0x50] sm:$0xff]
    %v1168 = vld [vmem:[#allocation9 + $0x58] sm:$0xff]
    %v1169 = vld [vmem:[#allocation9 + $0x60] sm:$0xff]
    %v1170 = vld [vmem:[#allocation9 + $0x68] sm:$0xff]
    %v1171 = vld [vmem:[#allocation9 + $0x70] sm:$0xff]
    %v1172 = vld [vmem:[#allocation9 + $0x78] sm:$0xff]
    %v1173 = vld [vmem:[#allocation9 + $0x80] sm:$0xff]
    %v1174 = vld [vmem:[#allocation9 + $0x88] sm:$0xff]
    %v1175 = vld [vmem:[#allocation9 + $0x90] sm:$0xff]
    %v1176 = vld [vmem:[#allocation9 + $0x98] sm:$0xff]
    %v1177 = vld [vmem:[#allocation9 + $0xa0] sm:$0xff]
    %v1178 = vld [vmem:[#allocation9 + $0xa8] sm:$0xff]
    %v1179 = vld [vmem:[#allocation9 + $0xb0] sm:$0xff]
    %v1180 = vld [vmem:[#allocation9 + $0xb8] sm:$0xff]
    %v1181 = vld [vmem:[#allocation12] sm:$0x3f]
    %v1183 = vlaneseq
    %v1184 = vshrl.u32 %v1183, 7
    %v1185 = vsub.s32 0, %v1184
    %v1186 = vrot.slane %v1181, %v1185
    %v1187 = vlaneseq
    %v1188 = vshrl.u32 %v1187, 7
    %v1189 = vsub.s32 1, %v1188
    %v1190 = vrot.slane %v1181, %v1189
    %v1191 = vlaneseq
    %v1192 = vshrl.u32 %v1191, 7
    %v1193 = vsub.s32 2, %v1192
    %v1194 = vrot.slane %v1181, %v1193
    %v1195 = vlaneseq
    %v1196 = vshrl.u32 %v1195, 7
    %v1197 = vsub.s32 3, %v1196
    %v1198 = vrot.slane %v1181, %v1197
    %v1199 = vlaneseq
    %v1200 = vshrl.u32 %v1199, 7
    %v1201 = vsub.s32 4, %v1200
    %v1202 = vrot.slane %v1181, %v1201
    %v1203 = vlaneseq
    %v1204 = vshrl.u32 %v1203, 7
    %v1205 = vsub.s32 5, %v1204
    %v1206 = vrot.slane %v1181, %v1205
    %v1237 = vunpack.c.l.b16 %v1157
    %v1238 = vunpack.c.h.b16 %v1157
    %v1239 = vunpack.c.l.b16 %v1158
    %v1240 = vunpack.c.h.b16 %v1158
    %v1241 = vunpack.c.l.b16 %v1159
    %v1242 = vunpack.c.h.b16 %v1159
    %v1243 = vunpack.c.l.b16 %v1160
    %v1244 = vunpack.c.h.b16 %v1160
    %v1245 = vunpack.c.l.b16 %v1161
    %v1246 = vunpack.c.h.b16 %v1161
    %v1247 = vunpack.c.l.b16 %v1162
    %v1248 = vunpack.c.h.b16 %v1162
    %v1249 = vunpack.c.l.b16 %v1163
    %v1250 = vunpack.c.h.b16 %v1163
    %v1251 = vunpack.c.l.b16 %v1164
    %v1252 = vunpack.c.h.b16 %v1164
    %v1253 = vunpack.c.l.b16 %v1165
    %v1254 = vunpack.c.h.b16 %v1165
    %v1255 = vunpack.c.l.b16 %v1166
    %v1256 = vunpack.c.h.b16 %v1166
    %v1257 = vunpack.c.l.b16 %v1167
    %v1258 = vunpack.c.h.b16 %v1167
    %v1259 = vunpack.c.l.b16 %v1168
    %v1260 = vunpack.c.h.b16 %v1168
    %v1261 = vunpack.c.l.b16 %v1169
    %v1262 = vunpack.c.h.b16 %v1169
    %v1263 = vunpack.c.l.b16 %v1170
    %v1264 = vunpack.c.h.b16 %v1170
    %v1265 = vunpack.c.l.b16 %v1171
    %v1266 = vunpack.c.h.b16 %v1171
    %v1267 = vunpack.c.l.b16 %v1172
    %v1268 = vunpack.c.h.b16 %v1172
    %v1269 = vunpack.c.l.b16 %v1173
    %v1270 = vunpack.c.h.b16 %v1173
    %v1271 = vunpack.c.l.b16 %v1174
    %v1272 = vunpack.c.h.b16 %v1174
    %v1273 = vunpack.c.l.b16 %v1175
    %v1274 = vunpack.c.h.b16 %v1175
    %v1275 = vunpack.c.l.b16 %v1176
    %v1276 = vunpack.c.h.b16 %v1176
    %v1277 = vunpack.c.l.b16 %v1177
    %v1278 = vunpack.c.h.b16 %v1177
    %v1279 = vunpack.c.l.b16 %v1178
    %v1280 = vunpack.c.h.b16 %v1178
    %v1281 = vunpack.c.l.b16 %v1179
    %v1282 = vunpack.c.h.b16 %v1179
    %v1283 = vunpack.c.l.b16 %v1180
    %v1284 = vunpack.c.h.b16 %v1180
    %v1285 = vpack.c.b16 %v1243, %v1237
    %v1286 = vpack.c.b16 %v1244, %v1238
    %v1287 = vpack.c.b16 %v1245, %v1239
    %v1288 = vpack.c.b16 %v1246, %v1240
    %v1289 = vpack.c.b16 %v1247, %v1241
    %v1290 = vpack.c.b16 %v1248, %v1242
    %v1291 = vpack.c.b16 %v1255, %v1249
    %v1292 = vpack.c.b16 %v1256, %v1250
    %v1293 = vpack.c.b16 %v1257, %v1251
    %v1294 = vpack.c.b16 %v1258, %v1252
    %v1295 = vpack.c.b16 %v1259, %v1253
    %v1296 = vpack.c.b16 %v1260, %v1254
    %v1297 = vpack.c.b16 %v1267, %v1261
    %v1298 = vpack.c.b16 %v1268, %v1262
    %v1299 = vpack.c.b16 %v1269, %v1263
    %v1300 = vpack.c.b16 %v1270, %v1264
    %v1301 = vpack.c.b16 %v1271, %v1265
    %v1302 = vpack.c.b16 %v1272, %v1266
    %v1303 = vpack.c.b16 %v1279, %v1273
    %v1304 = vpack.c.b16 %v1280, %v1274
    %v1305 = vpack.c.b16 %v1281, %v1275
    %v1306 = vpack.c.b16 %v1282, %v1276
    %v1307 = vpack.c.b16 %v1283, %v1277
    %v1308 = vpack.c.b16 %v1284, %v1278
    %vm1333 = vcmask 523264
    %v1335 = vsel %vm1333, %v1156, 0
    %1337 = vmatprep.subr.bf16.mxu0 %v1286
    %1338 = vmatpush1.bf16.msra.mxu0 %v1285
    %1339 = vmatprep.subr.bf16.mxu0 %v1292
    %1340 = vmatpush1.bf16.msra.mxu0 %v1291
    %1341 = vmatprep.subr.bf16.mxu0 %v1298
    %1342 = vmatpush1.bf16.msra.mxu0 %v1297
    %1343 = vmatprep.subr.bf16.mxu0 %v1304
    %1344 = vmatpush1.bf16.msra.mxu0 %v1303
    %1345 = vmatprep.subr.bf16.mxu0 0
    %1346 = vmatpush1.bf16.msra.mxu0 0
    %1347 = vmatprep.subr.bf16.mxu0 0
    %1348 = vmatpush1.bf16.msra.mxu0 0
    %1349 = vmatprep.subr.bf16.mxu0 0
    %1350 = vmatpush1.bf16.msra.mxu0 0
    %1351 = vmatprep.subr.bf16.mxu0 0
    %1352 = vmatpush1.bf16.msra.mxu0 0
    %1353 = vmatprep.subr.bf16.mxu0 0
    %1354 = vmatpush1.bf16.msra.mxu0 0
    %1355 = vmatprep.subr.bf16.mxu0 0
    %1356 = vmatpush1.bf16.msra.mxu0 0
    %1357 = vmatprep.subr.bf16.mxu0 0
    %1358 = vmatpush1.bf16.msra.mxu0 0
    %1359 = vmatprep.subr.bf16.mxu0 0
    %1360 = vmatpush1.bf16.msra.mxu0 0
    %1361 = vmatprep.subr.bf16.mxu0 0
    %1362 = vmatpush1.bf16.msra.mxu0 0
    %1363 = vmatprep.subr.bf16.mxu0 0
    %1364 = vmatpush1.bf16.msra.mxu0 0
    %1365 = vmatprep.subr.bf16.mxu0 0
    %1366 = vmatpush1.bf16.msra.mxu0 0
    %1367 = vmatprep.subr.bf16.mxu0 0
    %1368 = vmatpush1.bf16.msra.mxu0 0
    %1369 = vmatprep.mubr.bf16.mxu0 0
    %1370 = vmatmul.mubr.bf16.gmra.mrb[0].mxu0 %v1335
    %v1371 = vpop.f32.mrb[0].mxu0
    %v1372 = vadd.f32 %v1186, %v1371
    %v1373 = vpop.f32.mrb[0].mxu0
    %v1374 = vadd.f32 %v1190, %v1373
    %v1375 = vpop.f32.mrb[0].mxu0
    %v1376 = vpop.f32.mrb[0].mxu0
    %1377 = vdwg.mxu0
    %1378 = vmatprep.subr.bf16.mxu0 %v1288
    %1379 = vmatpush1.bf16.msra.mxu0 %v1287
    %1380 = vmatprep.subr.bf16.mxu0 %v1294
    %1381 = vmatpush1.bf16.msra.mxu0 %v1293
    %1382 = vmatprep.subr.bf16.mxu0 %v1300
    %1383 = vmatpush1.bf16.msra.mxu0 %v1299
    %1384 = vmatprep.subr.bf16.mxu0 %v1306
    %1385 = vmatpush1.bf16.msra.mxu0 %v1305
    %1386 = vmatprep.subr.bf16.mxu0 0
    %1387 = vmatpush1.bf16.msra.mxu0 0
    %1388 = vmatprep.subr.bf16.mxu0 0
    %1389 = vmatpush1.bf16.msra.mxu0 0
    %1390 = vmatprep.subr.bf16.mxu0 0
    %1391 = vmatpush1.bf16.msra.mxu0 0
    %1392 = vmatprep.subr.bf16.mxu0 0
    %1393 = vmatpush1.bf16.msra.mxu0 0
    %1394 = vmatprep.subr.bf16.mxu0 0
    %1395 = vmatpush1.bf16.msra.mxu0 0
    %1396 = vmatprep.subr.bf16.mxu0 0
    %1397 = vmatpush1.bf16.msra.mxu0 0
    %1398 = vmatprep.subr.bf16.mxu0 0
    %1399 = vmatpush1.bf16.msra.mxu0 0
    %1400 = vmatprep.subr.bf16.mxu0 0
    %1401 = vmatpush1.bf16.msra.mxu0 0
    %1402 = vmatprep.subr.bf16.mxu0 0
    %1403 = vmatpush1.bf16.msra.mxu0 0
    %1404 = vmatprep.subr.bf16.mxu0 0
    %1405 = vmatpush1.bf16.msra.mxu0 0
    %1406 = vmatprep.subr.bf16.mxu0 0
    %1407 = vmatpush1.bf16.msra.mxu0 0
    %1408 = vmatprep.subr.bf16.mxu0 0
    %1409 = vmatpush1.bf16.msra.mxu0 0
    %1410 = vmatprep.mubr.bf16.mxu0 0
    %1411 = vmatmul.mubr.bf16.gmra.mrb[0].mxu0 %v1335
    %v1412 = vpop.f32.mrb[0].mxu0
    %v1413 = vadd.f32 %v1194, %v1412
    %v1414 = vpop.f32.mrb[0].mxu0
    %v1415 = vadd.f32 %v1198, %v1414
    %v1416 = vpop.f32.mrb[0].mxu0
    %v1417 = vpop.f32.mrb[0].mxu0
    %1418 = vdwg.mxu0
    %1419 = vmatprep.subr.bf16.mxu0 %v1290
    %1420 = vmatpush1.bf16.msra.mxu0 %v1289
    %1421 = vmatprep.subr.bf16.mxu0 %v1296
    %1422 = vmatpush1.bf16.msra.mxu0 %v1295
    %1423 = vmatprep.subr.bf16.mxu0 %v1302
    %1424 = vmatpush1.bf16.msra.mxu0 %v1301
    %1425 = vmatprep.subr.bf16.mxu0 %v1308
    %1426 = vmatpush1.bf16.msra.mxu0 %v1307
    %1427 = vmatprep.subr.bf16.mxu0 0
    %1428 = vmatpush1.bf16.msra.mxu0 0
    %1429 = vmatprep.subr.bf16.mxu0 0
    %1430 = vmatpush1.bf16.msra.mxu0 0
    %1431 = vmatprep.subr.bf16.mxu0 0
    %1432 = vmatpush1.bf16.msra.mxu0 0
    %1433 = vmatprep.subr.bf16.mxu0 0
    %1434 = vmatpush1.bf16.msra.mxu0 0
    %1435 = vmatprep.subr.bf16.mxu0 0
    %1436 = vmatpush1.bf16.msra.mxu0 0
    %1437 = vmatprep.subr.bf16.mxu0 0
    %1438 = vmatpush1.bf16.msra.mxu0 0
    %1439 = vmatprep.subr.bf16.mxu0 0
    %1440 = vmatpush1.bf16.msra.mxu0 0
    %1441 = vmatprep.subr.bf16.mxu0 0
    %1442 = vmatpush1.bf16.msra.mxu0 0
    %1443 = vmatprep.subr.bf16.mxu0 0
    %1444 = vmatpush1.bf16.msra.mxu0 0
    %1445 = vmatprep.subr.bf16.mxu0 0
    %1446 = vmatpush1.bf16.msra.mxu0 0
    %1447 = vmatprep.subr.bf16.mxu0 0
    %1448 = vmatpush1.bf16.msra.mxu0 0
    %1449 = vmatprep.subr.bf16.mxu0 0
    %1450 = vmatpush1.bf16.msra.mxu0 0
    %1451 = vmatprep.mubr.bf16.mxu0 0
    %1452 = vmatmul.mubr.bf16.gmra.mrb[0].mxu0 %v1335
    %v1453 = vpop.f32.mrb[0].mxu0
    %v1454 = vadd.f32 %v1202, %v1453
    %v1455 = vpop.f32.mrb[0].mxu0
    %v1456 = vadd.f32 %v1206, %v1455
    %v1457 = vpop.f32.mrb[0].mxu0
    %v1458 = vpop.f32.mrb[0].mxu0
    %1459 = vdwg.mxu0
    %v1460 = vpack.c.bf16 %v211, %v211
    %v1461 = vld [vmem:[#allocation15] sm:$0xff]
    %v1462 = vld [vmem:[#allocation15 + $0x8] sm:$0xf]
    %v1463 = vld [vmem:[#allocation15 + $0xc] sm:$0xff]
    %v1464 = vld [vmem:[#allocation15 + $0x14] sm:$0xf]
    %v1465 = vld [vmem:[#allocation15 + $0x18] sm:$0xff]
    %v1466 = vld [vmem:[#allocation15 + $0x20] sm:$0xf]
    %v1467 = vld [vmem:[#allocation15 + $0x24] sm:$0xff]
    %v1468 = vld [vmem:[#allocation15 + $0x2c] sm:$0xf]
    %v1477 = vunpack.c.l.b16 %v1461
    %v1478 = vunpack.c.h.b16 %v1461
    %v1479 = vunpack.c.l.b16 %v1462
    %v1480 = vunpack.c.l.b16 %v1463
    %v1481 = vunpack.c.h.b16 %v1463
    %v1482 = vunpack.c.l.b16 %v1464
    %v1483 = vunpack.c.l.b16 %v1465
    %v1484 = vunpack.c.h.b16 %v1465
    %v1485 = vunpack.c.l.b16 %v1466
    %v1486 = vunpack.c.l.b16 %v1467
    %v1487 = vunpack.c.h.b16 %v1467
    %v1488 = vunpack.c.l.b16 %v1468
    %v1489 = vpack.c.b16 %v1480, %v1477
    %v1490 = vpack.c.b16 %v1481, %v1478
    %v1491 = vpack.c.b16 %v1482, %v1479
    %v1492 = vpack.c.b16 %v1486, %v1483
    %v1493 = vpack.c.b16 %v1487, %v1484
    %v1494 = vpack.c.b16 %v1488, %v1485
    %v1502 = vsel %vm883, %v1460, 0
    %1504 = vmatprep.subr.bf16.mxu0 %v1490
    %1505 = vmatpush1.bf16.msra.mxu0 %v1489
    %1506 = vmatprep.subr.bf16.mxu0 %v1493
    %1507 = vmatpush1.bf16.msra.mxu0 %v1492
    %1508 = vmatprep.subr.bf16.mxu0 0
    %1509 = vmatpush1.bf16.msra.mxu0 0
    %1510 = vmatprep.subr.bf16.mxu0 0
    %1511 = vmatpush1.bf16.msra.mxu0 0
    %1512 = vmatprep.subr.bf16.mxu0 0
    %1513 = vmatpush1.bf16.msra.mxu0 0
    %1514 = vmatprep.subr.bf16.mxu0 0
    %1515 = vmatpush1.bf16.msra.mxu0 0
    %1516 = vmatprep.subr.bf16.mxu0 0
    %1517 = vmatpush1.bf16.msra.mxu0 0
    %1518 = vmatprep.subr.bf16.mxu0 0
    %1519 = vmatpush1.bf16.msra.mxu0 0
    %1520 = vmatprep.subr.bf16.mxu0 0
    %1521 = vmatpush1.bf16.msra.mxu0 0
    %1522 = vmatprep.subr.bf16.mxu0 0
    %1523 = vmatpush1.bf16.msra.mxu0 0
    %1524 = vmatprep.subr.bf16.mxu0 0
    %1525 = vmatpush1.bf16.msra.mxu0 0
    %1526 = vmatprep.subr.bf16.mxu0 0
    %1527 = vmatpush1.bf16.msra.mxu0 0
    %1528 = vmatprep.subr.bf16.mxu0 0
    %1529 = vmatpush1.bf16.msra.mxu0 0
    %1530 = vmatprep.subr.bf16.mxu0 0
    %1531 = vmatpush1.bf16.msra.mxu0 0
    %1532 = vmatprep.subr.bf16.mxu0 0
    %1533 = vmatpush1.bf16.msra.mxu0 0
    %1534 = vmatprep.subr.bf16.mxu0 0
    %1535 = vmatpush1.bf16.msra.mxu0 0
    %1536 = vmatprep.mubr.bf16.mxu0 0
    %1537 = vmatmul.mubr.bf16.gmra.mrb[0].mxu0 %v1502
    %v1538 = vpop.f32.mrb[0].mxu0
    %v1539 = vadd.f32 0.0, %v1538
    %v1540 = vpop.f32.mrb[0].mxu0
    %v1541 = vadd.f32 0.0, %v1540
    %v1542 = vpop.f32.mrb[0].mxu0
    %v1543 = vpop.f32.mrb[0].mxu0
    %1544 = vdwg.mxu0
    %1545 = vmatprep.subr.bf16.mxu0 0
    %1546 = vmatpush1.bf16.msra.mxu0 %v1491
    %1547 = vmatprep.subr.bf16.mxu0 0
    %1548 = vmatpush1.bf16.msra.mxu0 %v1494
    %1549 = vmatprep.subr.bf16.mxu0 0
    %1550 = vmatpush1.bf16.msra.mxu0 0
    %1551 = vmatprep.subr.bf16.mxu0 0
    %1552 = vmatpush1.bf16.msra.mxu0 0
    %1553 = vmatprep.subr.bf16.mxu0 0
    %1554 = vmatpush1.bf16.msra.mxu0 0
    %1555 = vmatprep.subr.bf16.mxu0 0
    %1556 = vmatpush1.bf16.msra.mxu0 0
    %1557 = vmatprep.subr.bf16.mxu0 0
    %1558 = vmatpush1.bf16.msra.mxu0 0
    %1559 = vmatprep.subr.bf16.mxu0 0
    %1560 = vmatpush1.bf16.msra.mxu0 0
    %1561 = vmatprep.subr.bf16.mxu0 0
    %1562 = vmatpush1.bf16.msra.mxu0 0
    %1563 = vmatprep.subr.bf16.mxu0 0
    %1564 = vmatpush1.bf16.msra.mxu0 0
    %1565 = vmatprep.subr.bf16.mxu0 0
    %1566 = vmatpush1.bf16.msra.mxu0 0
    %1567 = vmatprep.subr.bf16.mxu0 0
    %1568 = vmatpush1.bf16.msra.mxu0 0
    %1569 = vmatprep.subr.bf16.mxu0 0
    %1570 = vmatpush1.bf16.msra.mxu0 0
    %1571 = vmatprep.subr.bf16.mxu0 0
    %1572 = vmatpush1.bf16.msra.mxu0 0
    %1573 = vmatprep.subr.bf16.mxu0 0
    %1574 = vmatpush1.bf16.msra.mxu0 0
    %1575 = vmatprep.subr.bf16.mxu0 0
    %1576 = vmatpush1.bf16.msra.mxu0 0
    %1577 = vmatprep.mubr.bf16.mxu0 0
    %1578 = vmatmul.mubr.bf16.gmra.mrb[0].mxu0 %v1502
    %v1579 = vpop.f32.mrb[0].mxu0
    %v1580 = vadd.f32 0.0, %v1579
    %v1581 = vpop.f32.mrb[0].mxu0
    %v1582 = vpop.f32.mrb[0].mxu0
    %v1583 = vpop.f32.mrb[0].mxu0
    %1584 = vdwg.mxu0
    %v1585 = vadd.f32 %v1372, %v1539
    %v1586 = vxor.u32 %v1585, 2147483648
    %v1587 = vmul.f32 %v1586, 1.442695
    %v1588 = vpow.pop %v1587
    %v1589 = vadd.f32 %v1588, 1.0
    %v1590 = vrcp.pop %v1589
    %v1591 = vmul.f32 1.0, %v1590
    %v1592 = vadd.f32 %v1374, %v1541
    %v1593 = vxor.u32 %v1592, 2147483648
    %v1594 = vmul.f32 %v1593, 1.442695
    %v1595 = vpow.pop %v1594
    %v1596 = vadd.f32 %v1595, 1.0
    %v1597 = vrcp.pop %v1596
    %v1598 = vmul.f32 1.0, %v1597
    %v1599 = vld [vmem:[#allocation20] sm:$0x1]
    %v1601 = vlaneseq
    %v1602 = vshrl.u32 %v1601, 7
    %v1603 = vsub.s32 0, %v1602
    %v1604 = vrot.slane %v1599, %v1603
    %v1606 = vadd.f32 %v1580, %v1604
    %v1607 = vmul.f32 %v1591, %v1606
    %v1608 = vadd.f32 %v1413, %v1607
    %v1609 = vtanh.pop %v1608
    %v1610 = vsub.f32 1.0, %v1598
    %v1611 = vmul.f32 %v1610, %v1609
    %v1612 = vmul.f32 %v1598, %v211
    %v1613 = vadd.f32 %v1611, %v1612
    %v1614 = vpack.c.bf16 %v213, %v213
    %v1615 = vld [vmem:[%s10] sm:$0xff]
    %v1616 = vld [vmem:[%s10 + $0x8] sm:$0xf]
    %v1617 = vld [vmem:[%s10 + $0xc] sm:$0xff]
    %v1618 = vld [vmem:[%s10 + $0x14] sm:$0xf]
    %v1619 = vld [vmem:[%s10 + $0x18] sm:$0xff]
    %v1620 = vld [vmem:[%s10 + $0x20] sm:$0xf]
    %v1621 = vld [vmem:[%s10 + $0x24] sm:$0xff]
    %v1622 = vld [vmem:[%s10 + $0x2c] sm:$0xf]
    %v1631 = vunpack.c.l.b16 %v1615
    %v1632 = vunpack.c.h.b16 %v1615
    %v1633 = vunpack.c.l.b16 %v1616
    %v1634 = vunpack.c.l.b16 %v1617
    %v1635 = vunpack.c.h.b16 %v1617
    %v1636 = vunpack.c.l.b16 %v1618
    %v1637 = vunpack.c.l.b16 %v1619
    %v1638 = vunpack.c.h.b16 %v1619
    %v1639 = vunpack.c.l.b16 %v1620
    %v1640 = vunpack.c.l.b16 %v1621
    %v1641 = vunpack.c.h.b16 %v1621
    %v1642 = vunpack.c.l.b16 %v1622
    %v1643 = vpack.c.b16 %v1634, %v1631
    %v1644 = vpack.c.b16 %v1635, %v1632
    %v1645 = vpack.c.b16 %v1636, %v1633
    %v1646 = vpack.c.b16 %v1640, %v1637
    %v1647 = vpack.c.b16 %v1641, %v1638
    %v1648 = vpack.c.b16 %v1642, %v1639
    %v1656 = vsel %vm883, %v1614, 0
    %1658 = vmatprep.subr.bf16.mxu0 %v1644
    %1659 = vmatpush1.bf16.msra.mxu0 %v1643
    %1660 = vmatprep.subr.bf16.mxu0 %v1647
    %1661 = vmatpush1.bf16.msra.mxu0 %v1646
    %1662 = vmatprep.subr.bf16.mxu0 0
    %1663 = vmatpush1.bf16.msra.mxu0 0
    %1664 = vmatprep.subr.bf16.mxu0 0
    %1665 = vmatpush1.bf16.msra.mxu0 0
    %1666 = vmatprep.subr.bf16.mxu0 0
    %1667 = vmatpush1.bf16.msra.mxu0 0
    %1668 = vmatprep.subr.bf16.mxu0 0
    %1669 = vmatpush1.bf16.msra.mxu0 0
    %1670 = vmatprep.subr.bf16.mxu0 0
    %1671 = vmatpush1.bf16.msra.mxu0 0
    %1672 = vmatprep.subr.bf16.mxu0 0
    %1673 = vmatpush1.bf16.msra.mxu0 0
    %1674 = vmatprep.subr.bf16.mxu0 0
    %1675 = vmatpush1.bf16.msra.mxu0 0
    %1676 = vmatprep.subr.bf16.mxu0 0
    %1677 = vmatpush1.bf16.msra.mxu0 0
    %1678 = vmatprep.subr.bf16.mxu0 0
    %1679 = vmatpush1.bf16.msra.mxu0 0
    %1680 = vmatprep.subr.bf16.mxu0 0
    %1681 = vmatpush1.bf16.msra.mxu0 0
    %1682 = vmatprep.subr.bf16.mxu0 0
    %1683 = vmatpush1.bf16.msra.mxu0 0
    %1684 = vmatprep.subr.bf16.mxu0 0
    %1685 = vmatpush1.bf16.msra.mxu0 0
    %1686 = vmatprep.subr.bf16.mxu0 0
    %1687 = vmatpush1.bf16.msra.mxu0 0
    %1688 = vmatprep.subr.bf16.mxu0 0
    %1689 = vmatpush1.bf16.msra.mxu0 0
    %1690 = vmatprep.mubr.bf16.mxu0 0
    %1691 = vmatmul.mubr.bf16.gmra.mrb[0].mxu0 %v1656
    %v1692 = vpop.f32.mrb[0].mxu0
    %v1693 = vadd.f32 0.0, %v1692
    %v1694 = vpop.f32.mrb[0].mxu0
    %v1695 = vadd.f32 0.0, %v1694
    %v1696 = vpop.f32.mrb[0].mxu0
    %v1697 = vpop.f32.mrb[0].mxu0
    %1698 = vdwg.mxu0
    %1699 = vmatprep.subr.bf16.mxu0 0
    %1700 = vmatpush1.bf16.msra.mxu0 %v1645
    %1701 = vmatprep.subr.bf16.mxu0 0
    %1702 = vmatpush1.bf16.msra.mxu0 %v1648
    %1703 = vmatprep.subr.bf16.mxu0 0
    %1704 = vmatpush1.bf16.msra.mxu0 0
    %1705 = vmatprep.subr.bf16.mxu0 0
    %1706 = vmatpush1.bf16.msra.mxu0 0
    %1707 = vmatprep.subr.bf16.mxu0 0
    %1708 = vmatpush1.bf16.msra.mxu0 0
    %1709 = vmatprep.subr.bf16.mxu0 0
    %1710 = vmatpush1.bf16.msra.mxu0 0
    %1711 = vmatprep.subr.bf16.mxu0 0
    %1712 = vmatpush1.bf16.msra.mxu0 0
    %1713 = vmatprep.subr.bf16.mxu0 0
    %1714 = vmatpush1.bf16.msra.mxu0 0
    %1715 = vmatprep.subr.bf16.mxu0 0
    %1716 = vmatpush1.bf16.msra.mxu0 0
    %1717 = vmatprep.subr.bf16.mxu0 0
    %1718 = vmatpush1.bf16.msra.mxu0 0
    %1719 = vmatprep.subr.bf16.mxu0 0
    %1720 = vmatpush1.bf16.msra.mxu0 0
    %1721 = vmatprep.subr.bf16.mxu0 0
    %1722 = vmatpush1.bf16.msra.mxu0 0
    %1723 = vmatprep.subr.bf16.mxu0 0
    %1724 = vmatpush1.bf16.msra.mxu0 0
    %1725 = vmatprep.subr.bf16.mxu0 0
    %1726 = vmatpush1.bf16.msra.mxu0 0
    %1727 = vmatprep.subr.bf16.mxu0 0
    %1728 = vmatpush1.bf16.msra.mxu0 0
    %1729 = vmatprep.subr.bf16.mxu0 0
    %1730 = vmatpush1.bf16.msra.mxu0 0
    %1731 = vmatprep.mubr.bf16.mxu0 0
    %1732 = vmatmul.mubr.bf16.gmra.mrb[0].mxu0 %v1656
    %v1733 = vpop.f32.mrb[0].mxu0
    %v1734 = vadd.f32 0.0, %v1733
    %v1735 = vpop.f32.mrb[0].mxu0
    %v1736 = vpop.f32.mrb[0].mxu0
    %v1737 = vpop.f32.mrb[0].mxu0
    %1738 = vdwg.mxu0
    %v1739 = vadd.f32 %v1415, %v1693
    %v1740 = vxor.u32 %v1739, 2147483648
    %v1741 = vmul.f32 %v1740, 1.442695
    %v1742 = vpow.pop %v1741
    %v1743 = vadd.f32 %v1742, 1.0
    %v1744 = vrcp.pop %v1743
    %v1745 = vmul.f32 1.0, %v1744
    %v1746 = vadd.f32 %v1454, %v1695
    %v1747 = vxor.u32 %v1746, 2147483648
    %v1748 = vmul.f32 %v1747, 1.442695
    %v1749 = vpow.pop %v1748
    %v1750 = vadd.f32 %v1749, 1.0
    %v1751 = vrcp.pop %v1750
    %v1752 = vmul.f32 1.0, %v1751
    %v1753 = vld [vmem:[#allocation21] sm:$0x1]
    %v1755 = vlaneseq
    %v1756 = vshrl.u32 %v1755, 7
    %v1757 = vsub.s32 0, %v1756
    %v1758 = vrot.slane %v1753, %v1757
    %v1760 = vadd.f32 %v1734, %v1758
    %v1761 = vmul.f32 %v1745, %v1760
    %v1762 = vadd.f32 %v1456, %v1761
    %v1763 = vtanh.pop %v1762
    %v1764 = vsub.f32 1.0, %v1752
    %v1765 = vmul.f32 %v1764, %v1763
    %v1766 = vmul.f32 %v1752, %v213
    %v1767 = vadd.f32 %v1765, %v1766
    %1769 = vrot.lane.b32.xlu0 %v1767, 32
    %v1770 = vpop.permute.xlu0 %1769
    %v1772 = vsel %vm883, %v1613, %v1770
    %v1773 = vpack.c.bf16 %v1772, %v1772
    %v1774 = vld [vmem:[%s15] sm:$0xf]
    %v1775 = vld [vmem:[%s15 + $0x4] sm:$0xf]
    %v1776 = vld [vmem:[%s15 + $0x8] sm:$0xf]
    %v1777 = vld [vmem:[%s15 + $0xc] sm:$0xf]
    %v1778 = vld [vmem:[%s15 + $0x10] sm:$0xf]
    %v1779 = vld [vmem:[%s15 + $0x14] sm:$0xf]
    %v1780 = vld [vmem:[%s15 + $0x18] sm:$0xf]
    %v1781 = vld [vmem:[%s15 + $0x1c] sm:$0xf]
    %v1782 = vld [vmem:[#allocation23] sm:$0x1]
    %v1784 = vlaneseq
    %v1785 = vshrl.u32 %v1784, 7
    %v1786 = vsub.s32 0, %v1785
    %v1787 = vrot.slane %v1782, %v1786
    %v1797 = vunpack.c.l.b16 %v1774
    %v1798 = vunpack.c.l.b16 %v1775
    %v1799 = vunpack.c.l.b16 %v1776
    %v1800 = vunpack.c.l.b16 %v1777
    %v1801 = vunpack.c.l.b16 %v1778
    %v1802 = vunpack.c.l.b16 %v1779
    %v1803 = vunpack.c.l.b16 %v1780
    %v1804 = vunpack.c.l.b16 %v1781
    %v1805 = vpack.c.b16 %v1798, %v1797
    %v1806 = vpack.c.b16 %v1800, %v1799
    %v1807 = vpack.c.b16 %v1802, %v1801
    %v1808 = vpack.c.b16 %v1804, %v1803
    %v1814 = vsel %vm1333, %v1773, 0
    %1816 = vmatprep.subr.bf16.mxu0 0
    %1817 = vmatpush1.bf16.msra.mxu0 %v1805
    %1818 = vmatprep.subr.bf16.mxu0 0
    %1819 = vmatpush1.bf16.msra.mxu0 %v1806
    %1820 = vmatprep.subr.bf16.mxu0 0
    %1821 = vmatpush1.bf16.msra.mxu0 %v1807
    %1822 = vmatprep.subr.bf16.mxu0 0
    %1823 = vmatpush1.bf16.msra.mxu0 %v1808
    %1824 = vmatprep.subr.bf16.mxu0 0
    %1825 = vmatpush1.bf16.msra.mxu0 0
    %1826 = vmatprep.subr.bf16.mxu0 0
    %1827 = vmatpush1.bf16.msra.mxu0 0
    %1828 = vmatprep.subr.bf16.mxu0 0
    %1829 = vmatpush1.bf16.msra.mxu0 0
    %1830 = vmatprep.subr.bf16.mxu0 0
    %1831 = vmatpush1.bf16.msra.mxu0 0
    %1832 = vmatprep.subr.bf16.mxu0 0
    %1833 = vmatpush1.bf16.msra.mxu0 0
    %1834 = vmatprep.subr.bf16.mxu0 0
    %1835 = vmatpush1.bf16.msra.mxu0 0
    %1836 = vmatprep.subr.bf16.mxu0 0
    %1837 = vmatpush1.bf16.msra.mxu0 0
    %1838 = vmatprep.subr.bf16.mxu0 0
    %1839 = vmatpush1.bf16.msra.mxu0 0
    %1840 = vmatprep.subr.bf16.mxu0 0
    %1841 = vmatpush1.bf16.msra.mxu0 0
    %1842 = vmatprep.subr.bf16.mxu0 0
    %1843 = vmatpush1.bf16.msra.mxu0 0
    %1844 = vmatprep.subr.bf16.mxu0 0
    %1845 = vmatpush1.bf16.msra.mxu0 0
    %1846 = vmatprep.subr.bf16.mxu0 0
    %1847 = vmatpush1.bf16.msra.mxu0 0
    %1848 = vmatprep.mubr.bf16.mxu0 0
    %1849 = vmatmul.mubr.bf16.gmra.mrb[0].mxu0 %v1814
    %v1850 = vpop.f32.mrb[0].mxu0
    %v1851 = vadd.f32 %v1787, %v1850
    %v1852 = vpop.f32.mrb[0].mxu0
    %v1853 = vpop.f32.mrb[0].mxu0
    %v1854 = vpop.f32.mrb[0].mxu0
    %1855 = vdwg.mxu0
    %1856 = vst.msk [vmem:[#allocation24] sm:$0xff] %vm883, %v1851
    %1857 = vst.msk [vmem:[#allocation25] sm:$0xff] %vm883, %v996
    %s1858 = scalar_lea.vmem [#allocation25], 8
    %1859 = vst.msk [vmem:[%s1858] sm:$0xff] %vm883, %v1150
    %s1860 = scalar_lea.vmem [#allocation25], 16
    %1861 = vst.msk [vmem:[%s1860] sm:$0xff] %vm883, %v1613
    %s1862 = scalar_lea.vmem [#allocation25], 24
    %1863 = vst.msk [vmem:[%s1862] sm:$0xff] %vm883, %v1767
    // Predicated region
    $region354: #{decoder_forward_pallas.1} parent=1 // pred_check
      _
    $region355: #{decoder_forward_pallas.1} parent=1 // pred_check_branch
      %1865 = sbr.rel (0) target = $region357
    $region356: #{decoder_forward_pallas.1} parent=1 // pred_region
      %s1867 = ssub.s32 128, 128
      %1868 = vsyncadd [#allocation6], %s1867
      %s1870 = sshll.u32 [#allocation24], 4
      %s1871 = int_to_ptr.vmem [resolvable:$true] %s1870
      %1873 = dma.vmem_to_hbm [thread:$0]  %s1871, 128, %s17, [#allocation6]
    $region357: #{decoder_forward_pallas.1} parent=1 // pred_fallthru
      _
    // Predicated region
    $region358: #{decoder_forward_pallas.1} parent=1 // pred_check
      _
    $region359: #{decoder_forward_pallas.1} parent=1 // pred_check_branch
      %1875 = sbr.rel (0) target = $region361
    $region360: #{decoder_forward_pallas.1} parent=1 // pred_region
      %s1877 = ssub.s32 512, 512
      %1878 = vsyncadd [#allocation26], %s1877
      %s1879 = sshll.u32 [#allocation25], 4
      %s1880 = int_to_ptr.vmem [resolvable:$true] %s1879
      %1885 = dma.vmem_to_hbm [thread:$0]  %s1880, 512, %s18, [#allocation26], 128, 128, 8
    $region361: #{decoder_forward_pallas.1} parent=1 // pred_fallthru
      _
    // Predicated region
    $region362: #{decoder_forward_pallas.1} parent=1 // pred_check
      _
    $region363: #{decoder_forward_pallas.1} parent=1 // pred_check_branch
      %1887 = sbr.rel (0) target = $region365
    $region364: #{decoder_forward_pallas.1} parent=1 // pred_region
      %1888 = dma.done [#allocation6], 128
    $region365: #{decoder_forward_pallas.1} parent=1 // pred_fallthru
      _
    // Predicated region
    $region366: #{decoder_forward_pallas.1} parent=1 // pred_check
      _
    $region367: #{decoder_forward_pallas.1} parent=1 // pred_check_branch
      %1890 = sbr.rel (0) target = $region369
    $region368: #{decoder_forward_pallas.1} parent=1 // pred_region
      %1891 = dma.done [#allocation26], 512
    $region369: #{decoder_forward_pallas.1} parent=1 // pred_fallthru
      _
    %1892 = vsyncpa [#allocation5], 1
    %1893 = vsyncpa [#allocation10], 1
    %1894 = vsyncpa [#allocation13], 1
    %1895 = vsyncpa [#allocation16], 1
    %1896 = vsyncpa [#allocation19], 1
    %1897 = vsyncpa [#allocation22], 1
    %1898 = vsyncpa [#allocation6], 1
    %1899 = vsyncpa [#allocation26], 1
    %1900 = vsyncpa [#allocation7], 1
  %1901 = vsyncmov [#allocation3]
  %s1902 = vpop.sfrf %1901
  %p1903 = scmp.eq.s32.totalorder %s1902, 0
  %p1904 = pneg %p1903
  %1906 = shalt.err (%p1904)
  %s1907 = scalar_lea.sflag [#allocation3], 1
  %1908 = vsyncmov %s1907
  %s1909 = vpop.sfrf %1908
  %p1910 = scmp.eq.s32.totalorder %s1909, 0
  %p1911 = pneg %p1910
  %1913 = shalt.err (%p1911)
  %s1914 = scalar_lea.sflag [#allocation3], 2
  %1915 = vsyncmov %s1914
  %s1916 = vpop.sfrf %1915
  %p1917 = scmp.eq.s32.totalorder %s1916, 0
  %p1918 = pneg %p1917
  %1920 = shalt.err (%p1918)
  %s1921 = scalar_lea.sflag [#allocation3], 3
  %1922 = vsyncmov %s1921
  %s1923 = vpop.sfrf %1922
  %p1924 = scmp.eq.s32.totalorder %s1923, 0
  %p1925 = pneg %p1924
  %1927 = shalt.err (%p1925)
  %s1928 = scalar_lea.sflag [#allocation3], 4
  %1929 = vsyncmov %s1928
  %s1930 = vpop.sfrf %1929
  %p1931 = scmp.eq.s32.totalorder %s1930, 0
  %p1932 = pneg %p1931
  %1934 = shalt.err (%p1932)
  %s1935 = scalar_lea.sflag [#allocation3], 5
  %1936 = vsyncmov %s1935
  %s1937 = vpop.sfrf %1936
  %p1938 = scmp.eq.s32.totalorder %s1937, 0
  %p1939 = pneg %p1938
  %1941 = shalt.err (%p1939)
  %s1942 = scalar_lea.sflag [#allocation3], 6
  %1943 = vsyncmov %s1942
  %s1944 = vpop.sfrf %1943
  %p1945 = scmp.eq.s32.totalorder %s1944, 0
  %p1946 = pneg %p1945
  %1948 = shalt.err (%p1946)
  %s1949 = scalar_lea.sflag [#allocation3], 7
  %1950 = vsyncmov %s1949
  %s1951 = vpop.sfrf %1950
  %p1952 = scmp.eq.s32.totalorder %s1951, 0
  %p1953 = pneg %p1952
  %1955 = shalt.err (%p1953)

</llo_original>
